<compile_context>
chip_gen: v7x
topology: tpu7x:2x2x1
jax: 0.10.0
libtpu: 0.0.40
codegen_flags: <defaults>
</compile_context>

<pallas_src>
import jax
import jax.numpy as jnp
from jax import lax
from jax.experimental import pallas as pl
from jax.experimental.pallas import tpu as pltpu

EPS = 1e-5
K = 3  # conv kernel size (BlockBn default kernel_size=3, stride=1, padding=1)


def _round_up(x, m):
    return (x + m - 1) // m * m


def _pick_tile_h(h):
    """Largest divisor of h that is <= max(8, h // 4) (keeps >=2 grid steps for pipelining)."""
    target = max(8, h // 4)
    best = 1
    for d in range(1, min(h, target) + 1):
        if h % d == 0:
            best = d
    return best


# ----------------------------------------------------------------------------- phase 1: conv + partial BN stats
def conv_stats_kernel(x_ref, w_ref, b_ref, conv_ref, stats_ref, xcat_ref):
    # x_ref:     (1, H, W, Cin)          full (unpadded) image for this n, resident across h tiles
    # w_ref:     (K, K*Cin, Cp)          taps, kw/cin fused on the contraction axis, Cout padded->Cp
    # b_ref:     (1, Cp)                 conv bias (f32)
    # conv_ref:  (1, th, W, Cp)          conv output tile (f32)
    # stats_ref: (1, 1, 2, Cp)           per-tile [sum, sum_sq] over (th, W)
    # xcat_ref:  (1, H+K-1, W, K*Cin)    scratch: H-padded, kw-shift-concatenated image (compute dtype)
    h = pl.program_id(1)
    _, H, W, Cin = x_ref.shape
    _, th, _, Cp = conv_ref.shape
    Kk, KC, _ = w_ref.shape
    cdt = xcat_ref.dtype

    # Build the shifted/concatenated operand once per image (h == 0), entirely in VMEM.
    @pl.when(h == 0)
    def _():
        x = x_ref[...].astype(cdt)                                   # (1, H, W, Cin)
        zc = jnp.zeros((1, H, 1, Cin), cdt)
        left = jnp.concatenate([zc, x[:, :, : W - 1, :]], axis=2)    # x[., w-1]  (kw = 0)
        right = jnp.concatenate([x[:, :, 1:, :], zc], axis=2)        # x[., w+1]  (kw = 2)
        xcat = jnp.concatenate([left, x, right], axis=3)             # (1, H, W, K*Cin)
        zr = jnp.zeros((1, 1, W, KC), cdt)
        xcat_ref[:, 0:1, :, :] = zr                                  # top halo row (zero pad)
        xcat_ref[:, H + Kk - 2:H + Kk - 1, :, :] = zr                # bottom halo row
        xcat_ref[:, 1:H + 1, :, :] = xcat

    # Rows needed by this tile (H axis is an outer dim -> cheap address-offset slicing).
    row0 = h * th
    patch = xcat_ref[:, pl.ds(row0, th + Kk - 1), :, :]              # (1, th+2, W, K*Cin)

    acc = jnp.zeros((th * W, Cp), jnp.float32)
    for kh in range(Kk):                                             # 3 fused-contraction matmuls
        a = patch[:, kh:kh + th, :, :].reshape(th * W, KC)
        acc = acc + jnp.dot(a, w_ref[kh], preferred_element_type=jnp.float32)
    acc = acc + b_ref[...]                                           # (1, Cp) broadcast

    conv_ref[...] = acc.reshape(1, th, W, Cp).astype(conv_ref.dtype)

    # Partial BN statistics for this tile (f32, same pass -- no second sweep over the accumulator).
    s = jnp.sum(acc, axis=0, keepdims=True)                          # (1, Cp)
    sq = jnp.sum(acc * acc, axis=0, keepdims=True)                   # (1, Cp)
    stats_ref[...] = jnp.concatenate([s, sq], axis=0).reshape(1, 1, 2, Cp)


# ----------------------------------------------------------------------------- phase 2: apply folded BN affine
def bn_apply_kernel(conv_ref, scale_ref, shift_ref, o_ref):
    Cp = scale_ref.shape[-1]
    scale = scale_ref[...].reshape(1, 1, 1, Cp)
    shift = shift_ref[...].reshape(1, 1, 1, Cp)
    o_ref[...] = (conv_ref[...] * scale + shift).astype(o_ref.dtype)


# ----------------------------------------------------------------------------- wrapper
def block_bn(x_nchw, w_oihw, bias, gamma, beta, *, compute_dtype=jnp.bfloat16, eps=EPS):
    """x_nchw: (N, Cin, H, W); w_oihw: (Cout, Cin, K, K); returns (N, Cout, H, W)."""
    N, Cin, H, W = x_nchw.shape
    Cout = w_oihw.shape[0]
    Cp = _round_up(Cout, 128)                      # lane-dense output channels
    th = _pick_tile_h(H)
    Gh = H // th

    x_nhwc = jnp.transpose(x_nchw, (0, 2, 3, 1))   # NCHW -> NHWC (channels on the lane axis)

    # wcat[kh, kw*Cin + c, o] = w[o, c, kh, kw]; pad Cout -> Cp; cast taps to the MXU dtype.
    wcat = jnp.transpose(w_oihw, (2, 3, 1, 0)).reshape(K, K * Cin, Cout)
    wcat = jnp.pad(wcat, ((0, 0), (0, 0), (0, Cp - Cout))).astype(compute_dtype)
    b_p = jnp.pad(bias.astype(jnp.float32), (0, Cp - Cout)).reshape(1, Cp)

    cparams = pltpu.CompilerParams(
        dimension_semantics=("parallel", "arbitrary"),   # N across cores; h sequential per image
        vmem_limit_bytes=48 * 1024 * 1024,
    )

    conv, stats = pl.pallas_call(
        conv_stats_kernel,
        grid=(N, Gh),
        in_specs=[
            pl.BlockSpec((1, H, W, Cin), lambda n, h: (n, 0, 0, 0)),   # resident across h
            pl.BlockSpec((K, K * Cin, Cp), lambda n, h: (0, 0, 0)),
            pl.BlockSpec((1, Cp), lambda n, h: (0, 0)),
        ],
        out_specs=[
            pl.BlockSpec((1, th, W, Cp), lambda n, h: (n, h, 0, 0)),
            pl.BlockSpec((1, 1, 2, Cp), lambda n, h: (n, h, 0, 0)),
        ],
        out_shape=[
            jax.ShapeDtypeStruct((N, H, W, Cp), jnp.float32),
            jax.ShapeDtypeStruct((N, Gh, 2, Cp), jnp.float32),
        ],
        scratch_shapes=[pltpu.VMEM((1, H + K - 1, W, K * Cin), compute_dtype)],
        compiler_params=cparams,
    )(x_nhwc, wcat, b_p)

    # Reduce the tiny per-tile partials -> global batch statistics; fold BN into scale/shift.
    cnt = jnp.float32(N * H * W)
    s = jnp.sum(stats[:, :, 0, :], axis=(0, 1))                 # (Cp,)
    sq = jnp.sum(stats[:, :, 1, :], axis=(0, 1))                # (Cp,)
    mean = s / cnt
    var = jnp.maximum(sq / cnt - mean * mean, 0.0)              # biased variance (train-mode BN)
    gamma_p = jnp.pad(gamma.astype(jnp.float32), (0, Cp - Cout))
    beta_p = jnp.pad(beta.astype(jnp.float32), (0, Cp - Cout))
    scale = (gamma_p * lax.rsqrt(var + eps)).reshape(1, Cp)
    shift = (beta_p - mean * scale[0]).reshape(1, Cp)

    y = pl.pallas_call(
        bn_apply_kernel,
        grid=(N, Gh),
        in_specs=[
            pl.BlockSpec((1, th, W, Cp), lambda n, h: (n, h, 0, 0)),
            pl.BlockSpec((1, Cp), lambda n, h: (0, 0)),
            pl.BlockSpec((1, Cp), lambda n, h: (0, 0)),
        ],
        out_specs=pl.BlockSpec((1, th, W, Cp), lambda n, h: (n, h, 0, 0)),
        out_shape=jax.ShapeDtypeStruct((N, H, W, Cp), x_nchw.dtype),
        compiler_params=pltpu.CompilerParams(
            dimension_semantics=("parallel", "parallel"),
            vmem_limit_bytes=48 * 1024 * 1024,
        ),
    )(conv, scale, shift)

    return jnp.transpose(y[:, :, :, :Cout], (0, 3, 1, 2))       # back to NCHW, drop channel pad


# ----------------------------------------------------------------------------- pure-JAX reference
def reference(x, w, b, gamma, beta):
    y = lax.conv_general_dilated(
        x, w, window_strides=(1, 1), padding=((1, 1), (1, 1)),
        dimension_numbers=('NCHW', 'OIHW', 'NCHW'),
        precision=lax.Precision.HIGHEST)
    y = y + b[None, :, None, None]
    mean = jnp.mean(y, axis=(0, 2, 3), keepdims=True)
    var = jnp.mean((y - mean) ** 2, axis=(0, 2, 3), keepdims=True)
    return ((y - mean) * lax.rsqrt(var + EPS)
            * gamma[None, :, None, None] + beta[None, :, None, None])


if __name__ == "__main__":
    key = jax.random.PRNGKey(0)
    k_x, k_w, k_b, k_g, k_bt = jax.random.split(key, 5)

    N, Cin, Cout, H, W = 2, 4, 8, 16, 16
    x = jax.random.normal(k_x, (N, Cin, H, W), dtype=jnp.float32)
    w = jax.random.normal(k_w, (Cout, Cin, K, K), dtype=jnp.float32) * 0.1
    b = jax.random.normal(k_b, (Cout,), dtype=jnp.float32) * 0.1
    gamma = 1.0 + 0.1 * jax.random.normal(k_g, (Cout,), dtype=jnp.float32)
    beta = 0.1 * jax.random.normal(k_bt, (Cout,), dtype=jnp.float32)

    ref = reference(x, w, b, gamma, beta)

    # f32 MXU path: tight check against the XLA reference.
    out_f32 = block_bn(x, w, b, gamma, beta, compute_dtype=jnp.float32)
    jax.block_until_ready(out_f32)
    assert out_f32.shape == (N, Cout, H, W)
    assert jnp.allclose(out_f32, ref, atol=1e-4, rtol=1e-4)

    # Default bf16 MXU path (the fast one); looser tolerance for bf16 tap rounding.
    out_bf16 = block_bn(x, w, b, gamma, beta)
    jax.block_until_ready(out_bf16)
    assert out_bf16.shape == (N, Cout, H, W)
    assert jnp.allclose(out_bf16, ref, atol=5e-2, rtol=5e-2)

    print("KERNEL_OK")
</pallas_src>

<mosaic_0001>
module attributes {stable_mosaic.version = 11 : i64} {
  func.func @conv_stats_kernel(%arg0: i32, %arg1: i32, %arg2: memref<1x16x16x4xf32, #tpu.memory_space<vmem>>, %arg3: memref<3x12x128xf32, #tpu.memory_space<vmem>>, %arg4: memref<1x128xf32, #tpu.memory_space<vmem>>, %arg5: memref<1x8x16x128xf32, #tpu.memory_space<vmem>>, %arg6: memref<1x1x2x128xf32, #tpu.memory_space<vmem>>, %arg7: memref<1x18x16x12xf32, #tpu.memory_space<vmem>>) attributes {dimension_semantics = [#tpu.dimension_semantics<parallel>, #tpu.dimension_semantics<arbitrary>], iteration_bounds = array<i64: 2, 2>, scalar_prefetch = 0 : i64, scratch_operands = 1 : i64, tpu.core_type = #tpu.core_type<tc>, window_params = [{transform_indices = @transform_0, window_bounds = array<i64: 1, 16, 16, 4>}, {pipeline_mode = #tpu.pipeline_mode<synchronous>, transform_indices = @transform_1, window_bounds = array<i64: 3, 12, 128>}, {pipeline_mode = #tpu.pipeline_mode<synchronous>, transform_indices = @transform_2, window_bounds = array<i64: 1, 128>}, {transform_indices = @transform_3, window_bounds = array<i64: 1, 8, 16, 128>}, {transform_indices = @transform_4, window_bounds = array<i64: 1, 1, 2, 128>}]} {
    %c0_i32 = arith.constant 0 : i32
    %0 = arith.cmpi eq, %arg1, %c0_i32 : i32
    %1 = arith.extui %0 : i1 to i32
    %c0_i32_0 = arith.constant 0 : i32
    %2 = arith.cmpi ne, %1, %c0_i32_0 : i32
    scf.if %2 {
      %c0_25 = arith.constant 0 : index
      %c0_26 = arith.constant 0 : index
      %c0_27 = arith.constant 0 : index
      %c0_28 = arith.constant 0 : index
      %38 = vector.load %arg2[%c0_25, %c0_26, %c0_27, %c0_28] : memref<1x16x16x4xf32, #tpu.memory_space<vmem>>, vector<1x16x16x4xf32>
      %cst_29 = arith.constant 0.000000e+00 : f32
      %39 = vector.broadcast %cst_29 : f32 to vector<1x16x1x4xf32>
      %40 = vector.extract_strided_slice %38 {offsets = [0, 0, 0, 0], sizes = [1, 16, 15, 4], strides = [1, 1, 1, 1]} : vector<1x16x16x4xf32> to vector<1x16x15x4xf32>
      %41 = tpu.concatenate %39, %40 in 2 : vector<1x16x1x4xf32>, vector<1x16x15x4xf32> -> vector<1x16x16x4xf32>
      %42 = vector.extract_strided_slice %38 {offsets = [0, 0, 1, 0], sizes = [1, 16, 15, 4], strides = [1, 1, 1, 1]} : vector<1x16x16x4xf32> to vector<1x16x15x4xf32>
      %43 = tpu.concatenate %42, %39 in 2 : vector<1x16x15x4xf32>, vector<1x16x1x4xf32> -> vector<1x16x16x4xf32>
      %44 = tpu.concatenate %41, %38, %43 in 3 : vector<1x16x16x4xf32>, vector<1x16x16x4xf32>, vector<1x16x16x4xf32> -> vector<1x16x16x12xf32>
      %cst_30 = arith.constant 0.000000e+00 : f32
      %45 = vector.broadcast %cst_30 : f32 to vector<1x1x16x12xf32>
      %c0_31 = arith.constant 0 : index
      %c0_32 = arith.constant 0 : index
      %c0_33 = arith.constant 0 : index
      %c0_34 = arith.constant 0 : index
      %46 = vector.load %arg7[%c0_31, %c0_32, %c0_33, %c0_34] : memref<1x18x16x12xf32, #tpu.memory_space<vmem>>, vector<1x1x16x12xf32>
      tpu.vector_store %arg7[%c0_31, %c0_32, %c0_33, %c0_34], %45 {strides = array<i32>} : memref<1x18x16x12xf32, #tpu.memory_space<vmem>>, vector<1x1x16x12xf32>,
      %c0_35 = arith.constant 0 : index
      %c17 = arith.constant 17 : index
      %c0_36 = arith.constant 0 : index
      %c0_37 = arith.constant 0 : index
      %47 = vector.load %arg7[%c0_35, %c17, %c0_36, %c0_37] : memref<1x18x16x12xf32, #tpu.memory_space<vmem>>, vector<1x1x16x12xf32>
      tpu.vector_store %arg7[%c0_35, %c17, %c0_36, %c0_37], %45 {strides = array<i32>} : memref<1x18x16x12xf32, #tpu.memory_space<vmem>>, vector<1x1x16x12xf32>,
      %c0_38 = arith.constant 0 : index
      %c1_39 = arith.constant 1 : index
      %c0_40 = arith.constant 0 : index
      %c0_41 = arith.constant 0 : index
      %48 = vector.load %arg7[%c0_38, %c1_39, %c0_40, %c0_41] : memref<1x18x16x12xf32, #tpu.memory_space<vmem>>, vector<1x16x16x12xf32>
      tpu.vector_store %arg7[%c0_38, %c1_39, %c0_40, %c0_41], %44 {strides = array<i32>} : memref<1x18x16x12xf32, #tpu.memory_space<vmem>>, vector<1x16x16x12xf32>,
    } else {
    }
    %c8_i32 = arith.constant 8 : i32
    %3 = arith.muli %arg1, %c8_i32 : i32
    %c0 = arith.constant 0 : index
    %4 = arith.index_cast %3 : i32 to index
    %c0_1 = arith.constant 0 : index
    %c0_2 = arith.constant 0 : index
    %5 = vector.load %arg7[%c0, %4, %c0_1, %c0_2] : memref<1x18x16x12xf32, #tpu.memory_space<vmem>>, vector<1x10x16x12xf32>
    %cst = arith.constant 0.000000e+00 : f32
    %6 = vector.broadcast %cst : f32 to vector<128x128xf32>
    %7 = vector.extract_strided_slice %5 {offsets = [0, 0, 0, 0], sizes = [1, 8, 16, 12], strides = [1, 1, 1, 1]} : vector<1x10x16x12xf32> to vector<1x8x16x12xf32>
    %8 = vector.shape_cast %7 : vector<1x8x16x12xf32> to vector<128x12xf32>
    %c0_3 = arith.constant 0 : index
    %c0_4 = arith.constant 0 : index
    %c0_5 = arith.constant 0 : index
    %9 = vector.load %arg3[%c0_3, %c0_4, %c0_5] : memref<3x12x128xf32, #tpu.memory_space<vmem>>, vector<1x12x128xf32>
    %10 = vector.shape_cast %9 : vector<1x12x128xf32> to vector<12x128xf32>
    %cst_6 = arith.constant dense<0.000000e+00> : vector<128x128xf32>
    %11 = tpu.matmul %8, %10, %cst_6 {dimension_numbers = #tpu.dot_dimension_numbers<[1], [0], [0], [1], [0, 0, 1, 1], [], []>} : vector<128x12xf32>, vector<12x128xf32>, vector<128x128xf32> -> vector<128x128xf32>
    %12 = arith.addf %6, %11 : vector<128x128xf32>
    %13 = vector.extract_strided_slice %5 {offsets = [0, 1, 0, 0], sizes = [1, 8, 16, 12], strides = [1, 1, 1, 1]} : vector<1x10x16x12xf32> to vector<1x8x16x12xf32>
    %14 = vector.shape_cast %13 : vector<1x8x16x12xf32> to vector<128x12xf32>
    %c1 = arith.constant 1 : index
    %c0_7 = arith.constant 0 : index
    %c0_8 = arith.constant 0 : index
    %15 = vector.load %arg3[%c1, %c0_7, %c0_8] : memref<3x12x128xf32, #tpu.memory_space<vmem>>, vector<1x12x128xf32>
    %16 = vector.shape_cast %15 : vector<1x12x128xf32> to vector<12x128xf32>
    %cst_9 = arith.constant dense<0.000000e+00> : vector<128x128xf32>
    %17 = tpu.matmul %14, %16, %cst_9 {dimension_numbers = #tpu.dot_dimension_numbers<[1], [0], [0], [1], [0, 0, 1, 1], [], []>} : vector<128x12xf32>, vector<12x128xf32>, vector<128x128xf32> -> vector<128x128xf32>
    %18 = arith.addf %12, %17 : vector<128x128xf32>
    %19 = vector.extract_strided_slice %5 {offsets = [0, 2, 0, 0], sizes = [1, 8, 16, 12], strides = [1, 1, 1, 1]} : vector<1x10x16x12xf32> to vector<1x8x16x12xf32>
    %20 = vector.shape_cast %19 : vector<1x8x16x12xf32> to vector<128x12xf32>
    %c2 = arith.constant 2 : index
    %c0_10 = arith.constant 0 : index
    %c0_11 = arith.constant 0 : index
    %21 = vector.load %arg3[%c2, %c0_10, %c0_11] : memref<3x12x128xf32, #tpu.memory_space<vmem>>, vector<1x12x128xf32>
    %22 = vector.shape_cast %21 : vector<1x12x128xf32> to vector<12x128xf32>
    %cst_12 = arith.constant dense<0.000000e+00> : vector<128x128xf32>
    %23 = tpu.matmul %20, %22, %cst_12 {dimension_numbers = #tpu.dot_dimension_numbers<[1], [0], [0], [1], [0, 0, 1, 1], [], []>} : vector<128x12xf32>, vector<12x128xf32>, vector<128x128xf32> -> vector<128x128xf32>
    %24 = arith.addf %18, %23 : vector<128x128xf32>
    %c0_13 = arith.constant 0 : index
    %c0_14 = arith.constant 0 : index
    %25 = vector.load %arg4[%c0_13, %c0_14] : memref<1x128xf32, #tpu.memory_space<vmem>>, vector<1x128xf32>
    %26 = vector.broadcast %25 : vector<1x128xf32> to vector<128x128xf32>
    %27 = arith.addf %24, %26 : vector<128x128xf32>
    %28 = vector.shape_cast %27 : vector<128x128xf32> to vector<1x8x16x128xf32>
    %c0_15 = arith.constant 0 : index
    %c0_16 = arith.constant 0 : index
    %c0_17 = arith.constant 0 : index
    %c0_18 = arith.constant 0 : index
    %29 = vector.load %arg5[%c0_15, %c0_16, %c0_17, %c0_18] : memref<1x8x16x128xf32, #tpu.memory_space<vmem>>, vector<1x8x16x128xf32>
    tpu.vector_store %arg5[%c0_15, %c0_16, %c0_17, %c0_18], %28 {strides = array<i32>} : memref<1x8x16x128xf32, #tpu.memory_space<vmem>>, vector<1x8x16x128xf32>,
    %cst_19 = arith.constant dense<0.000000e+00> : vector<128xf32>
    %30 = vector.multi_reduction <add>, %27, %cst_19 [0] : vector<128x128xf32> to vector<128xf32>
    %31 = vector.shape_cast %30 : vector<128xf32> to vector<1x128xf32>
    %32 = arith.mulf %27, %27 : vector<128x128xf32>
    %cst_20 = arith.constant dense<0.000000e+00> : vector<128xf32>
    %33 = vector.multi_reduction <add>, %32, %cst_20 [0] : vector<128x128xf32> to vector<128xf32>
    %34 = vector.shape_cast %33 : vector<128xf32> to vector<1x128xf32>
    %35 = tpu.concatenate %31, %34 in 0 : vector<1x128xf32>, vector<1x128xf32> -> vector<2x128xf32>
    %36 = vector.shape_cast %35 : vector<2x128xf32> to vector<1x1x2x128xf32>
    %c0_21 = arith.constant 0 : index
    %c0_22 = arith.constant 0 : index
    %c0_23 = arith.constant 0 : index
    %c0_24 = arith.constant 0 : index
    %37 = vector.load %arg6[%c0_21, %c0_22, %c0_23, %c0_24] : memref<1x1x2x128xf32, #tpu.memory_space<vmem>>, vector<1x1x2x128xf32>
    tpu.vector_store %arg6[%c0_21, %c0_22, %c0_23, %c0_24], %36 {strides = array<i32>} : memref<1x1x2x128xf32, #tpu.memory_space<vmem>>, vector<1x1x2x128xf32>,
    return
  }
  func.func @transform_0(%arg0: i32, %arg1: i32) -> (i32, i32, i32, i32) {
    %c0_i32 = arith.constant 0 : i32
    %c0_i32_0 = arith.constant 0 : i32
    %c0_i32_1 = arith.constant 0 : i32
    %c0_i32_2 = arith.constant 0 : i32
    return %arg0, %c0_i32, %c0_i32_0, %c0_i32_1 : i32, i32, i32, i32
  }
  func.func @transform_1(%arg0: i32, %arg1: i32) -> (i32, i32, i32) {
    %c0_i32 = arith.constant 0 : i32
    %c0_i32_0 = arith.constant 0 : i32
    %c0_i32_1 = arith.constant 0 : i32
    %c0_i32_2 = arith.constant 0 : i32
    return %c0_i32, %c0_i32_0, %c0_i32_1 : i32, i32, i32
  }
  func.func @transform_2(%arg0: i32, %arg1: i32) -> (i32, i32) {
    %c0_i32 = arith.constant 0 : i32
    %c0_i32_0 = arith.constant 0 : i32
    %c0_i32_1 = arith.constant 0 : i32
    return %c0_i32, %c0_i32_0 : i32, i32
  }
  func.func @transform_3(%arg0: i32, %arg1: i32) -> (i32, i32, i32, i32) {
    %c0_i32 = arith.constant 0 : i32
    %c0_i32_0 = arith.constant 0 : i32
    %c0_i32_1 = arith.constant 0 : i32
    return %arg0, %arg1, %c0_i32, %c0_i32_0 : i32, i32, i32, i32
  }
  func.func @transform_4(%arg0: i32, %arg1: i32) -> (i32, i32, i32, i32) {
    %c0_i32 = arith.constant 0 : i32
    %c0_i32_0 = arith.constant 0 : i32
    %c0_i32_1 = arith.constant 0 : i32
    return %arg0, %arg1, %c0_i32, %c0_i32_0 : i32, i32, i32, i32
  }
}

</mosaic_0001>

<llo_original>
// kernel: tpu_custom_call.1
$region0: #{tpu_custom_call.1}
  #allocation0 [shape = 'u32[]', space=smem, size = 0x4, offset = 0x4, fixed_abs, tag = 'smem constant byte address 0x4 - core index']
  #allocation1 [shape = 'u32[144,128]{1,0:T(1,128)}', space=vmem, size = 0x12000, scoped, tag = 'internal scratch']
  #allocation2 [shape = 'f32[1,18,16,12]{3,2,1,0:T(8,128)}', space=vmem, size = 0x24000, scoped, tag = 'scratch operand']
  %s0 = inlined_call_operand.vmem [shape: f32[2,16,16,4], index: 0, kind: input, shape index: {}]
  %s1 = inlined_call_operand.vmem [shape: f32[3,12,128], index: 1, kind: input, shape index: {}]
  %s2 = inlined_call_operand.vmem [shape: f32[1,128], index: 2, kind: input, shape index: {}]
  %s3 = inlined_call_operand.hbm [shape: f32[2,16,16,128], index: 3, kind: output, shape index: {0}]
  %s4 = inlined_call_operand.hbm [shape: f32[2,2,2,128], index: 4, kind: output, shape index: {1}]
  %5 = xla_tuple %s3, %s4
  %s6 = sld [smem:[#allocation0]]
  $region57: #{tpu_custom_call.1} parent=0
    _
  %s8 = ssub.s32 1, %s6
  %s9 = scalar_select 0, %s8, %s6
  $region1: #{tpu_custom_call.1} parent=0
    #allocation3 [shape = 'u8[131072]{0}', space=vmem, size = 0x20000, scoped, tag = 'output window, operand 0']
    #allocation4 [shape = 's32[2]{0}', space=sflag, size = 0x8, scoped, tag = 'scoped memory for tpu_custom_call.1']
    #allocation5 [shape = 'u8[2048]{0}', space=vmem, size = 0x800, scoped, tag = 'output window, operand 1']
    #allocation6 [shape = 's32[2]{0}', space=sflag, size = 0x8, scoped, tag = 'scoped memory for tpu_custom_call.1']
    %10 = vsyncpa [#allocation4], 0
    %s11 = scalar_lea.sflag [#allocation4], 1
    %12 = vsyncpa %s11, 0
    %13 = vsyncpa [#allocation6], 0
    %s14 = scalar_lea.sflag [#allocation6], 1
    %15 = vsyncpa %s14, 0
    loop: start=0, step=1, limit=6
    $region2: #{tpu_custom_call.1} parent=1 // loop_pre_header
      _
    $region3: #{tpu_custom_call.1} parent=1 // loop_header
      %s17 = sphi 0, %s21
      %p18 = scmp.ge.s32.totalorder %s17, 6
      %s24 = sphi 0, %s36
      %s25 = sphi 0, %s32
      %s26 = sphi 0, %s24
      %s27 = sphi 0, %s25
      %s28 = sphi 0, %s26
      %s29 = sphi 0, %s27
      %s39 = sphi 0, %s41
      %s42 = sphi 0, %s39
      %s43 = sphi 0, %s42
      %s59 = sphi 0, %s43
      %s63 = sphi 0, %s63
      %s65 = sphi 0, %s63
      %s66 = sphi 0, %s65
      %s80 = sphi 0, %s66
      %s84 = sphi 0, %s84
      %s86 = sphi 0, %s84
      %s87 = sphi 0, %s86
      %s101 = sphi 0, %s87
      %s109 = sphi 0, %s111
      %s112 = sphi 0, %s109
      %s113 = sphi 0, %s112
      %s129 = sphi 0, %s113
      %s137 = sphi 0, %s139
      %s140 = sphi 0, %s137
      %s141 = sphi 0, %s140
      %s157 = sphi 0, %s141
    $region4: #{tpu_custom_call.1} parent=1 // loop_header_branch
      %20 = sbr.rel (%p18) target = $region8
    $region5: #{tpu_custom_call.1} parent=1 // loop_body
      %s22 = ssub.s32 %s17, 1
      %s23 = ssub.s32 %s17, 2
      %s30 = sadd.s32 1, %s25
      %p31 = scmp.ge.s32.totalorder %s30, 2
      %s32 = scalar_select %p31, 0, %s30
      %s33 = sadd.s32 1, %s24
      %s34 = scalar_select %p31, %s33, %s24
      %p35 = scmp.ge.s32.totalorder %s34, 2
      %s36 = scalar_select %p35, 0, %s34
      %s37 = ssub.s32 %s24, %s36
      %p38 = scmp.eq.s32.totalorder %s37, 0
      %s40 = sadd.s32 %s39, 1
      %s41 = scalar_select %p38, %s39, %s40
      %p44 = pneg %p38
      %p45 = scmp.eq.s32.totalorder %s17, 3
      %p46 = por %p44, %p45
      %p47 = scmp.ne.s32.totalorder %s39, %s42
      %p48 = scmp.eq.s32.totalorder %s17, 0
      %p49 = por %p47, %p48
      %p50 = scmp.ne.s32.totalorder %s39, %s42
      %p51 = scmp.eq.s32.totalorder %s22, 3
      %p52 = por %p50, %p51
      %p53 = scmp.ne.s32.totalorder %s42, %s43
      %p54 = scmp.eq.s32.totalorder %s22, 0
      %p55 = por %p53, %p54
      %p56 = scmp.ne.s32.totalorder %s42, %s43
      %p57 = scmp.eq.s32.totalorder %s23, 3
      %p58 = por %p56, %p57
      %p60 = scmp.ne.s32.totalorder %s43, %s59
      %p61 = scmp.eq.s32.totalorder %s23, 0
      %p62 = por %p60, %p61
      %s64 = sadd.s32 %s63, 1
      %p67 = scmp.eq.s32.totalorder %s17, 3
      %p68 = scmp.ne.s32.totalorder %s63, %s65
      %p69 = scmp.eq.s32.totalorder %s17, 0
      %p70 = por %p68, %p69
      %p71 = scmp.ne.s32.totalorder %s63, %s65
      %p72 = scmp.eq.s32.totalorder %s22, 3
      %p73 = por %p71, %p72
      %p74 = scmp.ne.s32.totalorder %s65, %s66
      %p75 = scmp.eq.s32.totalorder %s22, 0
      %p76 = por %p74, %p75
      %p77 = scmp.ne.s32.totalorder %s65, %s66
      %p78 = scmp.eq.s32.totalorder %s23, 3
      %p79 = por %p77, %p78
      %p81 = scmp.ne.s32.totalorder %s66, %s80
      %p82 = scmp.eq.s32.totalorder %s23, 0
      %p83 = por %p81, %p82
      %s85 = sadd.s32 %s84, 1
      %p88 = scmp.eq.s32.totalorder %s17, 3
      %p89 = scmp.ne.s32.totalorder %s84, %s86
      %p90 = scmp.eq.s32.totalorder %s17, 0
      %p91 = por %p89, %p90
      %p92 = scmp.ne.s32.totalorder %s84, %s86
      %p93 = scmp.eq.s32.totalorder %s22, 3
      %p94 = por %p92, %p93
      %p95 = scmp.ne.s32.totalorder %s86, %s87
      %p96 = scmp.eq.s32.totalorder %s22, 0
      %p97 = por %p95, %p96
      %p98 = scmp.ne.s32.totalorder %s86, %s87
      %p99 = scmp.eq.s32.totalorder %s23, 3
      %p100 = por %p98, %p99
      %p102 = scmp.ne.s32.totalorder %s87, %s101
      %p103 = scmp.eq.s32.totalorder %s23, 0
      %p104 = por %p102, %p103
      %s105 = ssub.s32 %s24, %s36
      %s106 = ssub.s32 %s25, %s32
      %s107 = sor.u32 %s105, %s106
      %p108 = scmp.eq.s32.totalorder %s107, 0
      %s110 = sadd.s32 %s109, 1
      %s111 = scalar_select %p108, %s109, %s110
      %p114 = pneg %p108
      %p115 = scmp.eq.s32.totalorder %s17, 3
      %p116 = por %p114, %p115
      %p117 = scmp.ne.s32.totalorder %s109, %s112
      %p118 = scmp.eq.s32.totalorder %s17, 0
      %p119 = por %p117, %p118
      %p120 = scmp.ne.s32.totalorder %s109, %s112
      %p121 = scmp.eq.s32.totalorder %s22, 3
      %p122 = por %p120, %p121
      %p123 = scmp.ne.s32.totalorder %s112, %s113
      %p124 = scmp.eq.s32.totalorder %s22, 0
      %p125 = por %p123, %p124
      %p126 = scmp.ne.s32.totalorder %s112, %s113
      %p127 = scmp.eq.s32.totalorder %s23, 3
      %p128 = por %p126, %p127
      %p130 = scmp.ne.s32.totalorder %s113, %s129
      %p131 = scmp.eq.s32.totalorder %s23, 0
      %p132 = por %p130, %p131
      %s133 = ssub.s32 %s24, %s36
      %s134 = ssub.s32 %s25, %s32
      %s135 = sor.u32 %s133, %s134
      %p136 = scmp.eq.s32.totalorder %s135, 0
      %s138 = sadd.s32 %s137, 1
      %s139 = scalar_select %p136, %s137, %s138
      %p142 = pneg %p136
      %p143 = scmp.eq.s32.totalorder %s17, 3
      %p144 = por %p142, %p143
      %p145 = scmp.ne.s32.totalorder %s137, %s140
      %p146 = scmp.eq.s32.totalorder %s17, 0
      %p147 = por %p145, %p146
      %p148 = scmp.ne.s32.totalorder %s137, %s140
      %p149 = scmp.eq.s32.totalorder %s22, 3
      %p150 = por %p148, %p149
      %p151 = scmp.ne.s32.totalorder %s140, %s141
      %p152 = scmp.eq.s32.totalorder %s22, 0
      %p153 = por %p151, %p152
      %p154 = scmp.ne.s32.totalorder %s140, %s141
      %p155 = scmp.eq.s32.totalorder %s23, 3
      %p156 = por %p154, %p155
      %p158 = scmp.ne.s32.totalorder %s141, %s157
      %p159 = scmp.eq.s32.totalorder %s23, 0
      %p160 = por %p158, %p159
      %p161 = scmp.le.s32.totalorder 1, %s17
      %p162 = scmp.lt.s32.totalorder %s17, 5
      %p163 = pnand %p161, %p162
      %p164 = pneg %p163
      // Predicated region
      $region9: #{tpu_custom_call.1} parent=5 // pred_check
        _
      $region10: #{tpu_custom_call.1} parent=5 // pred_check_branch
        %166 = sbr.rel (%p163) target = $region12
      $region11: #{tpu_custom_call.1} parent=5 // pred_region
        %s167 = ssub.s32 %s17, 1
        // Predicated region
        $region13: #{tpu_custom_call.1} parent=11 // pred_check
          %p168 = pneg %p76
        $region14: #{tpu_custom_call.1} parent=11 // pred_check_branch
          %170 = sbr.rel (%p168) target = $region16
        $region15: #{tpu_custom_call.1} parent=11 // pred_region
          _
        $region16: #{tpu_custom_call.1} parent=11 // pred_fallthru
          _
        // Predicated region
        $region17: #{tpu_custom_call.1} parent=11 // pred_check
          %p171 = pneg %p97
        $region18: #{tpu_custom_call.1} parent=11 // pred_check_branch
          %173 = sbr.rel (%p171) target = $region20
        $region19: #{tpu_custom_call.1} parent=11 // pred_region
          _
        $region20: #{tpu_custom_call.1} parent=11 // pred_fallthru
          _
      $region12: #{tpu_custom_call.1} parent=5 // pred_fallthru
        _
      %p174 = scmp.lt.s32.totalorder %s17, 4
      // Predicated region
      $region21: #{tpu_custom_call.1} parent=5 // pred_check
        %p175 = pneg %p174
      $region22: #{tpu_custom_call.1} parent=5 // pred_check_branch
        %177 = sbr.rel (%p175) target = $region24
      $region23: #{tpu_custom_call.1} parent=5 // pred_region
        // Predicated region
        $region25: #{tpu_custom_call.1} parent=23 // pred_check
          %p178 = pneg %p49
        $region26: #{tpu_custom_call.1} parent=23 // pred_check_branch
          %180 = sbr.rel (%p178) target = $region28
        $region27: #{tpu_custom_call.1} parent=23 // pred_region
          %p181 = scmp.lt.s32.totalorder %s24, 1
          %s182 = scalar_select %p181, %s24, 1
          %s183 = smul.addr %s182, 32
          %s184 = smul.addr %s183, 8
          %s185 = scalar_lea.vmem %s0, %s184
        $region28: #{tpu_custom_call.1} parent=23 // pred_fallthru
          _
      $region24: #{tpu_custom_call.1} parent=5 // pred_fallthru
        _
      %p186 = scmp.le.s32.totalorder 1, %s17
      %p187 = scmp.lt.s32.totalorder %s17, 5
      %p188 = pnand %p186, %p187
      %p189 = pneg %p188
      // Predicated region
      $region29: #{tpu_custom_call.1} parent=5 // pred_check
        _
      $region30: #{tpu_custom_call.1} parent=5 // pred_check_branch
        %191 = sbr.rel (%p188) target = $region32
      $region31: #{tpu_custom_call.1} parent=5 // pred_region
        %s192 = ssub.s32 %s17, 1
        %p193 = scmp.lt.s32.totalorder %s26, 1
        %s194 = scalar_select %p193, %s26, 1
        %s195 = smul.addr %s194, 32
        %s196 = smul.addr %s195, 8
        %s197 = scalar_lea.vmem %s0, %s196
        %p198 = pneg %p55
        %p199 = pneg %p52
        %p200 = pneg %p76
        %p201 = pneg %p73
        %p202 = pneg %p97
        %p203 = pneg %p94
        %p204 = pneg %p125
        %p205 = pneg %p122
        %s206 = sand.u32 %s112, 1
        %s207 = scalar_lea.sflag [#allocation4], %s206
        %s208 = sand.u32 %s112, 1
        %s209 = smul.addr %s208, 128
        %s210 = scalar_lea.vmem [#allocation3], %s209
        %p211 = pneg %p153
        %p212 = pneg %p150
        %s213 = sand.u32 %s140, 1
        %s214 = scalar_lea.sflag [#allocation6], %s213
        %s215 = sand.u32 %s140, 1
        %s216 = smul.addr %s215, 2
        %s217 = scalar_lea.vmem [#allocation5], %s216
        %p218 = scmp.lt.s32.totalorder %s26, 1
        %s219 = scalar_select %p218, %s26, 1
        %s220 = smul.addr %s219, 32
        %s221 = smul.addr %s220, 8
        %s222 = scalar_lea.vmem %s0, %s221
        %s223 = smul.u32 8, %s27
        %p224 = scmp.eq.s32.totalorder %s27, 0
        // Predicated region
        $region33: #{tpu_custom_call.1} parent=31 // pred_check
          %p225 = pneg %p224
        $region34: #{tpu_custom_call.1} parent=31 // pred_check_branch
          %227 = sbr.rel (%p225) target = $region36
        $region35: #{tpu_custom_call.1} parent=31 // pred_region
          %v228 = vld [vmem:[%s222] sm:$0xff]
          %v229 = vld [vmem:[%s222 + $0x8] sm:$0xff]
          %v230 = vld [vmem:[%s222 + $0x10] sm:$0xff]
          %v231 = vld [vmem:[%s222 + $0x18] sm:$0xff]
          %v232 = vld [vmem:[%s222 + $0x20] sm:$0xff]
          %v233 = vld [vmem:[%s222 + $0x28] sm:$0xff]
          %v234 = vld [vmem:[%s222 + $0x30] sm:$0xff]
          %v235 = vld [vmem:[%s222 + $0x38] sm:$0xff]
          %v236 = vld [vmem:[%s222 + $0x40] sm:$0xff]
          %v237 = vld [vmem:[%s222 + $0x48] sm:$0xff]
          %v238 = vld [vmem:[%s222 + $0x50] sm:$0xff]
          %v239 = vld [vmem:[%s222 + $0x58] sm:$0xff]
          %v240 = vld [vmem:[%s222 + $0x60] sm:$0xff]
          %v241 = vld [vmem:[%s222 + $0x68] sm:$0xff]
          %v242 = vld [vmem:[%s222 + $0x70] sm:$0xff]
          %v243 = vld [vmem:[%s222 + $0x78] sm:$0xff]
          %v244 = vld [vmem:[%s222 + $0x80] sm:$0xff]
          %v245 = vld [vmem:[%s222 + $0x88] sm:$0xff]
          %v246 = vld [vmem:[%s222 + $0x90] sm:$0xff]
          %v247 = vld [vmem:[%s222 + $0x98] sm:$0xff]
          %v248 = vld [vmem:[%s222 + $0xa0] sm:$0xff]
          %v249 = vld [vmem:[%s222 + $0xa8] sm:$0xff]
          %v250 = vld [vmem:[%s222 + $0xb0] sm:$0xff]
          %v251 = vld [vmem:[%s222 + $0xb8] sm:$0xff]
          %v252 = vld [vmem:[%s222 + $0xc0] sm:$0xff]
          %v253 = vld [vmem:[%s222 + $0xc8] sm:$0xff]
          %v254 = vld [vmem:[%s222 + $0xd0] sm:$0xff]
          %v255 = vld [vmem:[%s222 + $0xd8] sm:$0xff]
          %v256 = vld [vmem:[%s222 + $0xe0] sm:$0xff]
          %v257 = vld [vmem:[%s222 + $0xe8] sm:$0xff]
          %v258 = vld [vmem:[%s222 + $0xf0] sm:$0xff]
          %v259 = vld [vmem:[%s222 + $0xf8] sm:$0xff]
          %vm292 = vcmask 1040384
          %v293 = vrot.slane %v228, 7
          %v294 = vrot.slane %v229, 7
          %v295 = vsel %vm292, %v293, %v294
          %v296 = vrot.slane %v230, 7
          %v297 = vrot.slane %v231, 7
          %v298 = vsel %vm292, %v296, %v297
          %v299 = vrot.slane %v232, 7
          %v300 = vrot.slane %v233, 7
          %v301 = vsel %vm292, %v299, %v300
          %v302 = vrot.slane %v234, 7
          %v303 = vrot.slane %v235, 7
          %v304 = vsel %vm292, %v302, %v303
          %v305 = vrot.slane %v236, 7
          %v306 = vrot.slane %v237, 7
          %v307 = vsel %vm292, %v305, %v306
          %v308 = vrot.slane %v238, 7
          %v309 = vrot.slane %v239, 7
          %v310 = vsel %vm292, %v308, %v309
          %v311 = vrot.slane %v240, 7
          %v312 = vrot.slane %v241, 7
          %v313 = vsel %vm292, %v311, %v312
          %v314 = vrot.slane %v242, 7
          %v315 = vrot.slane %v243, 7
          %v316 = vsel %vm292, %v314, %v315
          %v317 = vrot.slane %v244, 7
          %v318 = vrot.slane %v245, 7
          %v319 = vsel %vm292, %v317, %v318
          %v320 = vrot.slane %v246, 7
          %v321 = vrot.slane %v247, 7
          %v322 = vsel %vm292, %v320, %v321
          %v323 = vrot.slane %v248, 7
          %v324 = vrot.slane %v249, 7
          %v325 = vsel %vm292, %v323, %v324
          %v326 = vrot.slane %v250, 7
          %v327 = vrot.slane %v251, 7
          %v328 = vsel %vm292, %v326, %v327
          %v329 = vrot.slane %v252, 7
          %v330 = vrot.slane %v253, 7
          %v331 = vsel %vm292, %v329, %v330
          %v332 = vrot.slane %v254, 7
          %v333 = vrot.slane %v255, 7
          %v334 = vsel %vm292, %v332, %v333
          %v335 = vrot.slane %v256, 7
          %v336 = vrot.slane %v257, 7
          %v337 = vsel %vm292, %v335, %v336
          %v338 = vrot.slane %v258, 7
          %v339 = vrot.slane %v259, 7
          %v340 = vsel %vm292, %v338, %v339
          %v373 = vsel %vm292, 0.0, %v293
          %v374 = vsel %vm292, 0.0, %v296
          %v375 = vsel %vm292, 0.0, %v299
          %v376 = vsel %vm292, 0.0, %v302
          %v377 = vsel %vm292, 0.0, %v305
          %v378 = vsel %vm292, 0.0, %v308
          %v379 = vsel %vm292, 0.0, %v311
          %v380 = vsel %vm292, 0.0, %v314
          %v381 = vsel %vm292, 0.0, %v317
          %v382 = vsel %vm292, 0.0, %v320
          %v383 = vsel %vm292, 0.0, %v323
          %v384 = vsel %vm292, 0.0, %v326
          %v385 = vsel %vm292, 0.0, %v329
          %v386 = vsel %vm292, 0.0, %v332
          %v387 = vsel %vm292, 0.0, %v335
          %v388 = vsel %vm292, 0.0, %v338
          %vm389 = vcmask 1046528
          %v390 = vrot.slane %v228, 1
          %v391 = vrot.slane %v229, 1
          %v392 = vsel %vm389, %v390, %v391
          %v393 = vrot.slane %v230, 1
          %v394 = vrot.slane %v231, 1
          %v395 = vsel %vm389, %v393, %v394
          %v396 = vrot.slane %v232, 1
          %v397 = vrot.slane %v233, 1
          %v398 = vsel %vm389, %v396, %v397
          %v399 = vrot.slane %v234, 1
          %v400 = vrot.slane %v235, 1
          %v401 = vsel %vm389, %v399, %v400
          %v402 = vrot.slane %v236, 1
          %v403 = vrot.slane %v237, 1
          %v404 = vsel %vm389, %v402, %v403
          %v405 = vrot.slane %v238, 1
          %v406 = vrot.slane %v239, 1
          %v407 = vsel %vm389, %v405, %v406
          %v408 = vrot.slane %v240, 1
          %v409 = vrot.slane %v241, 1
          %v410 = vsel %vm389, %v408, %v409
          %v411 = vrot.slane %v242, 1
          %v412 = vrot.slane %v243, 1
          %v413 = vsel %vm389, %v411, %v412
          %v414 = vrot.slane %v244, 1
          %v415 = vrot.slane %v245, 1
          %v416 = vsel %vm389, %v414, %v415
          %v417 = vrot.slane %v246, 1
          %v418 = vrot.slane %v247, 1
          %v419 = vsel %vm389, %v417, %v418
          %v420 = vrot.slane %v248, 1
          %v421 = vrot.slane %v249, 1
          %v422 = vsel %vm389, %v420, %v421
          %v423 = vrot.slane %v250, 1
          %v424 = vrot.slane %v251, 1
          %v425 = vsel %vm389, %v423, %v424
          %v426 = vrot.slane %v252, 1
          %v427 = vrot.slane %v253, 1
          %v428 = vsel %vm389, %v426, %v427
          %v429 = vrot.slane %v254, 1
          %v430 = vrot.slane %v255, 1
          %v431 = vsel %vm389, %v429, %v430
          %v432 = vrot.slane %v256, 1
          %v433 = vrot.slane %v257, 1
          %v434 = vsel %vm389, %v432, %v433
          %v435 = vrot.slane %v258, 1
          %v436 = vrot.slane %v259, 1
          %v437 = vsel %vm389, %v435, %v436
          %v454 = vsel %vm389, %v391, 0.0
          %v455 = vsel %vm389, %v394, 0.0
          %v456 = vsel %vm389, %v397, 0.0
          %v457 = vsel %vm389, %v400, 0.0
          %v458 = vsel %vm389, %v403, 0.0
          %v459 = vsel %vm389, %v406, 0.0
          %v460 = vsel %vm389, %v409, 0.0
          %v461 = vsel %vm389, %v412, 0.0
          %v462 = vsel %vm389, %v415, 0.0
          %v463 = vsel %vm389, %v418, 0.0
          %v464 = vsel %vm389, %v421, 0.0
          %v465 = vsel %vm389, %v424, 0.0
          %v466 = vsel %vm389, %v427, 0.0
          %v467 = vsel %vm389, %v430, 0.0
          %v468 = vsel %vm389, %v433, 0.0
          %v469 = vsel %vm389, %v436, 0.0
          %470 = vrot.lane.b32.xlu0 %v228, 4
          %v471 = vpop.permute.xlu0 %470
          %472 = vrot.lane.b32.xlu0 %v229, 4
          %v473 = vpop.permute.xlu0 %472
          %474 = vrot.lane.b32.xlu0 %v230, 4
          %v475 = vpop.permute.xlu0 %474
          %476 = vrot.lane.b32.xlu0 %v231, 4
          %v477 = vpop.permute.xlu0 %476
          %478 = vrot.lane.b32.xlu0 %v232, 4
          %v479 = vpop.permute.xlu0 %478
          %480 = vrot.lane.b32.xlu0 %v233, 4
          %v481 = vpop.permute.xlu0 %480
          %482 = vrot.lane.b32.xlu0 %v234, 4
          %v483 = vpop.permute.xlu0 %482
          %484 = vrot.lane.b32.xlu0 %v235, 4
          %v485 = vpop.permute.xlu0 %484
          %486 = vrot.lane.b32.xlu0 %v236, 4
          %v487 = vpop.permute.xlu0 %486
          %488 = vrot.lane.b32.xlu0 %v237, 4
          %v489 = vpop.permute.xlu0 %488
          %490 = vrot.lane.b32.xlu0 %v238, 4
          %v491 = vpop.permute.xlu0 %490
          %492 = vrot.lane.b32.xlu0 %v239, 4
          %v493 = vpop.permute.xlu0 %492
          %494 = vrot.lane.b32.xlu0 %v240, 4
          %v495 = vpop.permute.xlu0 %494
          %496 = vrot.lane.b32.xlu0 %v241, 4
          %v497 = vpop.permute.xlu0 %496
          %498 = vrot.lane.b32.xlu0 %v242, 4
          %v499 = vpop.permute.xlu0 %498
          %500 = vrot.lane.b32.xlu0 %v243, 4
          %v501 = vpop.permute.xlu0 %500
          %502 = vrot.lane.b32.xlu0 %v244, 4
          %v503 = vpop.permute.xlu0 %502
          %504 = vrot.lane.b32.xlu0 %v245, 4
          %v505 = vpop.permute.xlu0 %504
          %506 = vrot.lane.b32.xlu0 %v246, 4
          %v507 = vpop.permute.xlu0 %506
          %508 = vrot.lane.b32.xlu0 %v247, 4
          %v509 = vpop.permute.xlu0 %508
          %510 = vrot.lane.b32.xlu0 %v248, 4
          %v511 = vpop.permute.xlu0 %510
          %512 = vrot.lane.b32.xlu0 %v249, 4
          %v513 = vpop.permute.xlu0 %512
          %514 = vrot.lane.b32.xlu0 %v250, 4
          %v515 = vpop.permute.xlu0 %514
          %516 = vrot.lane.b32.xlu0 %v251, 4
          %v517 = vpop.permute.xlu0 %516
          %518 = vrot.lane.b32.xlu0 %v252, 4
          %v519 = vpop.permute.xlu0 %518
          %520 = vrot.lane.b32.xlu0 %v253, 4
          %v521 = vpop.permute.xlu0 %520
          %522 = vrot.lane.b32.xlu0 %v254, 4
          %v523 = vpop.permute.xlu0 %522
          %524 = vrot.lane.b32.xlu0 %v255, 4
          %v525 = vpop.permute.xlu0 %524
          %526 = vrot.lane.b32.xlu0 %v256, 4
          %v527 = vpop.permute.xlu0 %526
          %528 = vrot.lane.b32.xlu0 %v257, 4
          %v529 = vpop.permute.xlu0 %528
          %530 = vrot.lane.b32.xlu0 %v258, 4
          %v531 = vpop.permute.xlu0 %530
          %532 = vrot.lane.b32.xlu0 %v259, 4
          %v533 = vpop.permute.xlu0 %532
          %582 = vrot.lane.b32.xlu0 %v392, 8
          %v583 = vpop.permute.xlu0 %582
          %584 = vrot.lane.b32.xlu0 %v454, 8
          %v585 = vpop.permute.xlu0 %584
          %586 = vrot.lane.b32.xlu0 %v395, 8
          %v587 = vpop.permute.xlu0 %586
          %588 = vrot.lane.b32.xlu0 %v455, 8
          %v589 = vpop.permute.xlu0 %588
          %590 = vrot.lane.b32.xlu0 %v398, 8
          %v591 = vpop.permute.xlu0 %590
          %592 = vrot.lane.b32.xlu0 %v456, 8
          %v593 = vpop.permute.xlu0 %592
          %594 = vrot.lane.b32.xlu0 %v401, 8
          %v595 = vpop.permute.xlu0 %594
          %596 = vrot.lane.b32.xlu0 %v457, 8
          %v597 = vpop.permute.xlu0 %596
          %598 = vrot.lane.b32.xlu0 %v404, 8
          %v599 = vpop.permute.xlu0 %598
          %600 = vrot.lane.b32.xlu0 %v458, 8
          %v601 = vpop.permute.xlu0 %600
          %602 = vrot.lane.b32.xlu0 %v407, 8
          %v603 = vpop.permute.xlu0 %602
          %604 = vrot.lane.b32.xlu0 %v459, 8
          %v605 = vpop.permute.xlu0 %604
          %606 = vrot.lane.b32.xlu0 %v410, 8
          %v607 = vpop.permute.xlu0 %606
          %608 = vrot.lane.b32.xlu0 %v460, 8
          %v609 = vpop.permute.xlu0 %608
          %610 = vrot.lane.b32.xlu0 %v413, 8
          %v611 = vpop.permute.xlu0 %610
          %612 = vrot.lane.b32.xlu0 %v461, 8
          %v613 = vpop.permute.xlu0 %612
          %614 = vrot.lane.b32.xlu0 %v416, 8
          %v615 = vpop.permute.xlu0 %614
          %616 = vrot.lane.b32.xlu0 %v462, 8
          %v617 = vpop.permute.xlu0 %616
          %618 = vrot.lane.b32.xlu0 %v419, 8
          %v619 = vpop.permute.xlu0 %618
          %620 = vrot.lane.b32.xlu0 %v463, 8
          %v621 = vpop.permute.xlu0 %620
          %622 = vrot.lane.b32.xlu0 %v422, 8
          %v623 = vpop.permute.xlu0 %622
          %624 = vrot.lane.b32.xlu0 %v464, 8
          %v625 = vpop.permute.xlu0 %624
          %626 = vrot.lane.b32.xlu0 %v425, 8
          %v627 = vpop.permute.xlu0 %626
          %628 = vrot.lane.b32.xlu0 %v465, 8
          %v629 = vpop.permute.xlu0 %628
          %630 = vrot.lane.b32.xlu0 %v428, 8
          %v631 = vpop.permute.xlu0 %630
          %632 = vrot.lane.b32.xlu0 %v466, 8
          %v633 = vpop.permute.xlu0 %632
          %634 = vrot.lane.b32.xlu0 %v431, 8
          %v635 = vpop.permute.xlu0 %634
          %636 = vrot.lane.b32.xlu0 %v467, 8
          %v637 = vpop.permute.xlu0 %636
          %638 = vrot.lane.b32.xlu0 %v434, 8
          %v639 = vpop.permute.xlu0 %638
          %640 = vrot.lane.b32.xlu0 %v468, 8
          %v641 = vpop.permute.xlu0 %640
          %642 = vrot.lane.b32.xlu0 %v437, 8
          %v643 = vpop.permute.xlu0 %642
          %644 = vrot.lane.b32.xlu0 %v469, 8
          %v645 = vpop.permute.xlu0 %644
          %vm678 = vcmask 31744
          %v679 = vsel %vm678, %v373, %v471
          %v680 = vsel %vm678, %v295, %v473
          %v681 = vsel %vm678, %v374, %v475
          %v682 = vsel %vm678, %v298, %v477
          %v683 = vsel %vm678, %v375, %v479
          %v684 = vsel %vm678, %v301, %v481
          %v685 = vsel %vm678, %v376, %v483
          %v686 = vsel %vm678, %v304, %v485
          %v687 = vsel %vm678, %v377, %v487
          %v688 = vsel %vm678, %v307, %v489
          %v689 = vsel %vm678, %v378, %v491
          %v690 = vsel %vm678, %v310, %v493
          %v691 = vsel %vm678, %v379, %v495
          %v692 = vsel %vm678, %v313, %v497
          %v693 = vsel %vm678, %v380, %v499
          %v694 = vsel %vm678, %v316, %v501
          %v695 = vsel %vm678, %v381, %v503
          %v696 = vsel %vm678, %v319, %v505
          %v697 = vsel %vm678, %v382, %v507
          %v698 = vsel %vm678, %v322, %v509
          %v699 = vsel %vm678, %v383, %v511
          %v700 = vsel %vm678, %v325, %v513
          %v701 = vsel %vm678, %v384, %v515
          %v702 = vsel %vm678, %v328, %v517
          %v703 = vsel %vm678, %v385, %v519
          %v704 = vsel %vm678, %v331, %v521
          %v705 = vsel %vm678, %v386, %v523
          %v706 = vsel %vm678, %v334, %v525
          %v707 = vsel %vm678, %v387, %v527
          %v708 = vsel %vm678, %v337, %v529
          %v709 = vsel %vm678, %v388, %v531
          %v710 = vsel %vm678, %v340, %v533
          %vm711 = vcmask 64512
          %v712 = vsel %vm711, %v679, %v583
          %v713 = vsel %vm711, %v680, %v585
          %v714 = vsel %vm711, %v681, %v587
          %v715 = vsel %vm711, %v682, %v589
          %v716 = vsel %vm711, %v683, %v591
          %v717 = vsel %vm711, %v684, %v593
          %v718 = vsel %vm711, %v685, %v595
          %v719 = vsel %vm711, %v686, %v597
          %v720 = vsel %vm711, %v687, %v599
          %v721 = vsel %vm711, %v688, %v601
          %v722 = vsel %vm711, %v689, %v603
          %v723 = vsel %vm711, %v690, %v605
          %v724 = vsel %vm711, %v691, %v607
          %v725 = vsel %vm711, %v692, %v609
          %v726 = vsel %vm711, %v693, %v611
          %v727 = vsel %vm711, %v694, %v613
          %v728 = vsel %vm711, %v695, %v615
          %v729 = vsel %vm711, %v696, %v617
          %v730 = vsel %vm711, %v697, %v619
          %v731 = vsel %vm711, %v698, %v621
          %v732 = vsel %vm711, %v699, %v623
          %v733 = vsel %vm711, %v700, %v625
          %v734 = vsel %vm711, %v701, %v627
          %v735 = vsel %vm711, %v702, %v629
          %v736 = vsel %vm711, %v703, %v631
          %v737 = vsel %vm711, %v704, %v633
          %v738 = vsel %vm711, %v705, %v635
          %v739 = vsel %vm711, %v706, %v637
          %v740 = vsel %vm711, %v707, %v639
          %v741 = vsel %vm711, %v708, %v641
          %v742 = vsel %vm711, %v709, %v643
          %v743 = vsel %vm711, %v710, %v645
          %vm744 = vcmask 97280
          %745 = vst.msk [vmem:[#allocation2] sm:$0xff] %vm744, 0.0
          %746 = vst.msk [vmem:[#allocation2 + $0x8] sm:$0xff] %vm744, 0.0
          %s747 = scalar_lea.vmem [#allocation2], 272
          %748 = vst.msk [vmem:[%s747] sm:$0xff] %vm744, 0.0
          %749 = vst.msk [vmem:[%s747 + $0x8] sm:$0xff] %vm744, 0.0
          %s750 = scalar_lea.vmem [#allocation2], 16
          %751 = vst.msk [vmem:[%s750] sm:$0xff] %vm744, %v712
          %752 = vst.msk [vmem:[%s750 + $0x8] sm:$0xff] %vm744, %v713
          %753 = vst.msk [vmem:[%s750 + $0x10] sm:$0xff] %vm744, %v714
          %754 = vst.msk [vmem:[%s750 + $0x18] sm:$0xff] %vm744, %v715
          %755 = vst.msk [vmem:[%s750 + $0x20] sm:$0xff] %vm744, %v716
          %756 = vst.msk [vmem:[%s750 + $0x28] sm:$0xff] %vm744, %v717
          %757 = vst.msk [vmem:[%s750 + $0x30] sm:$0xff] %vm744, %v718
          %758 = vst.msk [vmem:[%s750 + $0x38] sm:$0xff] %vm744, %v719
          %759 = vst.msk [vmem:[%s750 + $0x40] sm:$0xff] %vm744, %v720
          %760 = vst.msk [vmem:[%s750 + $0x48] sm:$0xff] %vm744, %v721
          %761 = vst.msk [vmem:[%s750 + $0x50] sm:$0xff] %vm744, %v722
          %762 = vst.msk [vmem:[%s750 + $0x58] sm:$0xff] %vm744, %v723
          %763 = vst.msk [vmem:[%s750 + $0x60] sm:$0xff] %vm744, %v724
          %764 = vst.msk [vmem:[%s750 + $0x68] sm:$0xff] %vm744, %v725
          %765 = vst.msk [vmem:[%s750 + $0x70] sm:$0xff] %vm744, %v726
          %766 = vst.msk [vmem:[%s750 + $0x78] sm:$0xff] %vm744, %v727
          %767 = vst.msk [vmem:[%s750 + $0x80] sm:$0xff] %vm744, %v728
          %768 = vst.msk [vmem:[%s750 + $0x88] sm:$0xff] %vm744, %v729
          %769 = vst.msk [vmem:[%s750 + $0x90] sm:$0xff] %vm744, %v730
          %770 = vst.msk [vmem:[%s750 + $0x98] sm:$0xff] %vm744, %v731
          %771 = vst.msk [vmem:[%s750 + $0xa0] sm:$0xff] %vm744, %v732
          %772 = vst.msk [vmem:[%s750 + $0xa8] sm:$0xff] %vm744, %v733
          %773 = vst.msk [vmem:[%s750 + $0xb0] sm:$0xff] %vm744, %v734
          %774 = vst.msk [vmem:[%s750 + $0xb8] sm:$0xff] %vm744, %v735
          %775 = vst.msk [vmem:[%s750 + $0xc0] sm:$0xff] %vm744, %v736
          %776 = vst.msk [vmem:[%s750 + $0xc8] sm:$0xff] %vm744, %v737
          %777 = vst.msk [vmem:[%s750 + $0xd0] sm:$0xff] %vm744, %v738
          %778 = vst.msk [vmem:[%s750 + $0xd8] sm:$0xff] %vm744, %v739
          %779 = vst.msk [vmem:[%s750 + $0xe0] sm:$0xff] %vm744, %v740
          %780 = vst.msk [vmem:[%s750 + $0xe8] sm:$0xff] %vm744, %v741
          %781 = vst.msk [vmem:[%s750 + $0xf0] sm:$0xff] %vm744, %v742
          %782 = vst.msk [vmem:[%s750 + $0xf8] sm:$0xff] %vm744, %v743
        $region36: #{tpu_custom_call.1} parent=31 // pred_fallthru
          _
        %s783 = smul.u32 %s27, 8
        %s784 = smul.u32 %s783, 16
        %s785 = scalar_lea.vmem [#allocation2], %s784
        %v786 = vld [vmem:[%s785] sm:$0xff]
        %v787 = vld [vmem:[%s785 + $0x8] sm:$0xff]
        %v788 = vld [vmem:[%s785 + $0x10] sm:$0xff]
        %v789 = vld [vmem:[%s785 + $0x18] sm:$0xff]
        %v790 = vld [vmem:[%s785 + $0x20] sm:$0xff]
        %v791 = vld [vmem:[%s785 + $0x28] sm:$0xff]
        %v792 = vld [vmem:[%s785 + $0x30] sm:$0xff]
        %v793 = vld [vmem:[%s785 + $0x38] sm:$0xff]
        %v794 = vld [vmem:[%s785 + $0x40] sm:$0xff]
        %v795 = vld [vmem:[%s785 + $0x48] sm:$0xff]
        %v796 = vld [vmem:[%s785 + $0x50] sm:$0xff]
        %v797 = vld [vmem:[%s785 + $0x58] sm:$0xff]
        %v798 = vld [vmem:[%s785 + $0x60] sm:$0xff]
        %v799 = vld [vmem:[%s785 + $0x68] sm:$0xff]
        %v800 = vld [vmem:[%s785 + $0x70] sm:$0xff]
        %v801 = vld [vmem:[%s785 + $0x78] sm:$0xff]
        %v802 = vld [vmem:[%s785 + $0x80] sm:$0xff]
        %v803 = vld [vmem:[%s785 + $0x88] sm:$0xff]
        %v804 = vld [vmem:[%s785 + $0x90] sm:$0xff]
        %v805 = vld [vmem:[%s785 + $0x98] sm:$0xff]
        %v806 = vld [vmem:[%s1] sm:$0xff]
        %v807 = vld [vmem:[%s1 + $0x8] sm:$0xf]
        %s808 = scalar_lea.vmem %s1, 16
        %v809 = vld [vmem:[%s808] sm:$0xff]
        %v810 = vld [vmem:[%s808 + $0x8] sm:$0xf]
        %vm811 = vcmask 97280
        %v813 = vsel %vm811, %v788, 0
        %v816 = vsel %vm811, %v789, 0
        %v819 = vsel %vm811, %v790, 0
        %v822 = vsel %vm811, %v791, 0
        %v825 = vsel %vm811, %v792, 0
        %v828 = vsel %vm811, %v793, 0
        %v831 = vsel %vm811, %v794, 0
        %v834 = vsel %vm811, %v795, 0
        %v837 = vsel %vm811, %v796, 0
        %v840 = vsel %vm811, %v797, 0
        %v843 = vsel %vm811, %v798, 0
        %v846 = vsel %vm811, %v799, 0
        %v849 = vsel %vm811, %v800, 0
        %v852 = vsel %vm811, %v801, 0
        %v855 = vsel %vm811, %v802, 0
        %v858 = vsel %vm811, %v803, 0
        %vm860 = vcmask 1043456
        %v862 = vsel %vm860, %v810, 0
        %864 = vmatprep.subr.mxu0 0.0
        %865 = vmatpush1.msra.mxu0 %v809
        %866 = vmatprep.subr.mxu0 0.0
        %867 = vmatpush1.msra.mxu0 %v862
        %868 = vmatprep.subr.mxu0 0.0
        %869 = vmatpush1.msra.mxu0 0.0
        %870 = vmatprep.subr.mxu0 0.0
        %871 = vmatpush1.msra.mxu0 0.0
        %872 = vmatprep.subr.mxu0 0.0
        %873 = vmatpush1.msra.mxu0 0.0
        %874 = vmatprep.subr.mxu0 0.0
        %875 = vmatpush1.msra.mxu0 0.0
        %876 = vmatprep.subr.mxu0 0.0
        %877 = vmatpush1.msra.mxu0 0.0
        %878 = vmatprep.subr.mxu0 0.0
        %879 = vmatpush1.msra.mxu0 0.0
        %880 = vmatprep.subr.mxu0 0.0
        %881 = vmatpush1.msra.mxu0 0.0
        %882 = vmatprep.subr.mxu0 0.0
        %883 = vmatpush1.msra.mxu0 0.0
        %884 = vmatprep.subr.mxu0 0.0
        %885 = vmatpush1.msra.mxu0 0.0
        %886 = vmatprep.subr.mxu0 0.0
        %887 = vmatpush1.msra.mxu0 0.0
        %888 = vmatprep.subr.mxu0 0.0
        %889 = vmatpush1.msra.mxu0 0.0
        %890 = vmatprep.subr.mxu0 0.0
        %891 = vmatpush1.msra.mxu0 0.0
        %892 = vmatprep.subr.mxu0 0.0
        %893 = vmatpush1.msra.mxu0 0.0
        %894 = vmatprep.subr.mxu0 0.0
        %895 = vmatpush1.msra.mxu0 0.0
        %896 = vmatprep.subr.mxu0 0.0
        %897 = vmatpush1.msra.mxu0 0.0
        %898 = vmatprep.subr.mxu0 0.0
        %899 = vmatpush1.msra.mxu0 0.0
        %900 = vmatprep.subr.mxu0 0.0
        %901 = vmatpush1.msra.mxu0 0.0
        %902 = vmatprep.subr.mxu0 0.0
        %903 = vmatpush1.msra.mxu0 0.0
        %904 = vmatprep.subr.mxu0 0.0
        %905 = vmatpush1.msra.mxu0 0.0
        %906 = vmatprep.subr.mxu0 0.0
        %907 = vmatpush1.msra.mxu0 0.0
        %908 = vmatprep.subr.mxu0 0.0
        %909 = vmatpush1.msra.mxu0 0.0
        %910 = vmatprep.subr.mxu0 0.0
        %911 = vmatpush1.msra.mxu0 0.0
        %912 = vmatprep.subr.mxu0 0.0
        %913 = vmatpush1.msra.mxu0 0.0
        %914 = vmatprep.subr.mxu0 0.0
        %915 = vmatpush1.msra.mxu0 0.0
        %916 = vmatprep.subr.mxu0 0.0
        %917 = vmatpush1.msra.mxu0 0.0
        %918 = vmatprep.subr.mxu0 0.0
        %919 = vmatpush1.msra.mxu0 0.0
        %920 = vmatprep.subr.mxu0 0.0
        %921 = vmatpush1.msra.mxu0 0.0
        %922 = vmatprep.subr.mxu0 0.0
        %923 = vmatpush1.msra.mxu0 0.0
        %924 = vmatprep.subr.mxu0 0.0
        %925 = vmatpush1.msra.mxu0 0.0
        %926 = vmatprep.subr.mxu0 0.0
        %927 = vmatpush1.msra.mxu0 0.0
        %928 = vmatprep.mubr.f32.mxu0 0.0
        %929 = vmatmul.mubr.f32.gmra.mrb[0].mxu0 %v813
        %v930 = vpop.f32.mrb[0].mxu0
        %v931 = vadd.f32 0.0, %v930
        %v932 = vpop.f32.mrb[0].mxu0
        %933 = vmatprep.mubr.f32.mxu0 0.0
        %934 = vmatmul.mubr.f32.gmra.mrb[0].mxu0 %v816
        %v935 = vpop.f32.mrb[0].mxu0
        %v936 = vadd.f32 0.0, %v935
        %v937 = vpop.f32.mrb[0].mxu0
        %938 = vmatprep.mubr.f32.mxu0 0.0
        %939 = vmatmul.mubr.f32.gmra.mrb[0].mxu0 %v819
        %v940 = vpop.f32.mrb[0].mxu0
        %v941 = vadd.f32 0.0, %v940
        %v942 = vpop.f32.mrb[0].mxu0
        %943 = vmatprep.mubr.f32.mxu0 0.0
        %944 = vmatmul.mubr.f32.gmra.mrb[0].mxu0 %v822
        %v945 = vpop.f32.mrb[0].mxu0
        %v946 = vadd.f32 0.0, %v945
        %v947 = vpop.f32.mrb[0].mxu0
        %948 = vmatprep.mubr.f32.mxu0 0.0
        %949 = vmatmul.mubr.f32.gmra.mrb[0].mxu0 %v825
        %v950 = vpop.f32.mrb[0].mxu0
        %v951 = vadd.f32 0.0, %v950
        %v952 = vpop.f32.mrb[0].mxu0
        %953 = vmatprep.mubr.f32.mxu0 0.0
        %954 = vmatmul.mubr.f32.gmra.mrb[0].mxu0 %v828
        %v955 = vpop.f32.mrb[0].mxu0
        %v956 = vadd.f32 0.0, %v955
        %v957 = vpop.f32.mrb[0].mxu0
        %958 = vmatprep.mubr.f32.mxu0 0.0
        %959 = vmatmul.mubr.f32.gmra.mrb[0].mxu0 %v831
        %v960 = vpop.f32.mrb[0].mxu0
        %v961 = vadd.f32 0.0, %v960
        %v962 = vpop.f32.mrb[0].mxu0
        %963 = vmatprep.mubr.f32.mxu0 0.0
        %964 = vmatmul.mubr.f32.gmra.mrb[0].mxu0 %v834
        %v965 = vpop.f32.mrb[0].mxu0
        %v966 = vadd.f32 0.0, %v965
        %v967 = vpop.f32.mrb[0].mxu0
        %968 = vmatprep.mubr.f32.mxu0 0.0
        %969 = vmatmul.mubr.f32.gmra.mrb[0].mxu0 %v837
        %v970 = vpop.f32.mrb[0].mxu0
        %v971 = vadd.f32 0.0, %v970
        %v972 = vpop.f32.mrb[0].mxu0
        %973 = vmatprep.mubr.f32.mxu0 0.0
        %974 = vmatmul.mubr.f32.gmra.mrb[0].mxu0 %v840
        %v975 = vpop.f32.mrb[0].mxu0
        %v976 = vadd.f32 0.0, %v975
        %v977 = vpop.f32.mrb[0].mxu0
        %978 = vmatprep.mubr.f32.mxu0 0.0
        %979 = vmatmul.mubr.f32.gmra.mrb[0].mxu0 %v843
        %v980 = vpop.f32.mrb[0].mxu0
        %v981 = vadd.f32 0.0, %v980
        %v982 = vpop.f32.mrb[0].mxu0
        %983 = vmatprep.mubr.f32.mxu0 0.0
        %984 = vmatmul.mubr.f32.gmra.mrb[0].mxu0 %v846
        %v985 = vpop.f32.mrb[0].mxu0
        %v986 = vadd.f32 0.0, %v985
        %v987 = vpop.f32.mrb[0].mxu0
        %988 = vmatprep.mubr.f32.mxu0 0.0
        %989 = vmatmul.mubr.f32.gmra.mrb[0].mxu0 %v849
        %v990 = vpop.f32.mrb[0].mxu0
        %v991 = vadd.f32 0.0, %v990
        %v992 = vpop.f32.mrb[0].mxu0
        %993 = vmatprep.mubr.f32.mxu0 0.0
        %994 = vmatmul.mubr.f32.gmra.mrb[0].mxu0 %v852
        %v995 = vpop.f32.mrb[0].mxu0
        %v996 = vadd.f32 0.0, %v995
        %v997 = vpop.f32.mrb[0].mxu0
        %998 = vmatprep.mubr.f32.mxu0 0.0
        %999 = vmatmul.mubr.f32.gmra.mrb[0].mxu0 %v855
        %v1000 = vpop.f32.mrb[0].mxu0
        %v1001 = vadd.f32 0.0, %v1000
        %v1002 = vpop.f32.mrb[0].mxu0
        %1003 = vmatprep.mubr.f32.mxu0 0.0
        %1004 = vmatmul.mubr.f32.gmra.mrb[0].mxu0 %v858
        %v1005 = vpop.f32.mrb[0].mxu0
        %v1006 = vadd.f32 0.0, %v1005
        %v1007 = vpop.f32.mrb[0].mxu0
        %1008 = vdwg.mxu0
        %v1010 = vsel %vm811, %v786, 0
        %v1013 = vsel %vm811, %v787, 0
        %v1016 = vsel %vm860, %v807, 0
        %1018 = vmatprep.subr.mxu0 0.0
        %1019 = vmatpush1.msra.mxu0 %v806
        %1020 = vmatprep.subr.mxu0 0.0
        %1021 = vmatpush1.msra.mxu0 %v1016
        %1022 = vmatprep.subr.mxu0 0.0
        %1023 = vmatpush1.msra.mxu0 0.0
        %1024 = vmatprep.subr.mxu0 0.0
        %1025 = vmatpush1.msra.mxu0 0.0
        %1026 = vmatprep.subr.mxu0 0.0
        %1027 = vmatpush1.msra.mxu0 0.0
        %1028 = vmatprep.subr.mxu0 0.0
        %1029 = vmatpush1.msra.mxu0 0.0
        %1030 = vmatprep.subr.mxu0 0.0
        %1031 = vmatpush1.msra.mxu0 0.0
        %1032 = vmatprep.subr.mxu0 0.0
        %1033 = vmatpush1.msra.mxu0 0.0
        %1034 = vmatprep.subr.mxu0 0.0
        %1035 = vmatpush1.msra.mxu0 0.0
        %1036 = vmatprep.subr.mxu0 0.0
        %1037 = vmatpush1.msra.mxu0 0.0
        %1038 = vmatprep.subr.mxu0 0.0
        %1039 = vmatpush1.msra.mxu0 0.0
        %1040 = vmatprep.subr.mxu0 0.0
        %1041 = vmatpush1.msra.mxu0 0.0
        %1042 = vmatprep.subr.mxu0 0.0
        %1043 = vmatpush1.msra.mxu0 0.0
        %1044 = vmatprep.subr.mxu0 0.0
        %1045 = vmatpush1.msra.mxu0 0.0
        %1046 = vmatprep.subr.mxu0 0.0
        %1047 = vmatpush1.msra.mxu0 0.0
        %1048 = vmatprep.subr.mxu0 0.0
        %1049 = vmatpush1.msra.mxu0 0.0
        %1050 = vmatprep.subr.mxu0 0.0
        %1051 = vmatpush1.msra.mxu0 0.0
        %1052 = vmatprep.subr.mxu0 0.0
        %1053 = vmatpush1.msra.mxu0 0.0
        %1054 = vmatprep.subr.mxu0 0.0
        %1055 = vmatpush1.msra.mxu0 0.0
        %1056 = vmatprep.subr.mxu0 0.0
        %1057 = vmatpush1.msra.mxu0 0.0
        %1058 = vmatprep.subr.mxu0 0.0
        %1059 = vmatpush1.msra.mxu0 0.0
        %1060 = vmatprep.subr.mxu0 0.0
        %1061 = vmatpush1.msra.mxu0 0.0
        %1062 = vmatprep.subr.mxu0 0.0
        %1063 = vmatpush1.msra.mxu0 0.0
        %1064 = vmatprep.subr.mxu0 0.0
        %1065 = vmatpush1.msra.mxu0 0.0
        %1066 = vmatprep.subr.mxu0 0.0
        %1067 = vmatpush1.msra.mxu0 0.0
        %1068 = vmatprep.subr.mxu0 0.0
        %1069 = vmatpush1.msra.mxu0 0.0
        %1070 = vmatprep.subr.mxu0 0.0
        %1071 = vmatpush1.msra.mxu0 0.0
        %1072 = vmatprep.subr.mxu0 0.0
        %1073 = vmatpush1.msra.mxu0 0.0
        %1074 = vmatprep.subr.mxu0 0.0
        %1075 = vmatpush1.msra.mxu0 0.0
        %1076 = vmatprep.subr.mxu0 0.0
        %1077 = vmatpush1.msra.mxu0 0.0
        %1078 = vmatprep.subr.mxu0 0.0
        %1079 = vmatpush1.msra.mxu0 0.0
        %1080 = vmatprep.subr.mxu0 0.0
        %1081 = vmatpush1.msra.mxu0 0.0
        %1082 = vmatprep.mubr.f32.mxu0 0.0
        %1083 = vmatmul.mubr.f32.gmra.mrb[0].mxu0 %v1010
        %v1084 = vpop.f32.mrb[0].mxu0
        %v1085 = vadd.f32 %v931, %v1084
        %v1086 = vpop.f32.mrb[0].mxu0
        %1087 = vmatprep.mubr.f32.mxu0 0.0
        %1088 = vmatmul.mubr.f32.gmra.mrb[0].mxu0 %v1013
        %v1089 = vpop.f32.mrb[0].mxu0
        %v1090 = vadd.f32 %v936, %v1089
        %v1091 = vpop.f32.mrb[0].mxu0
        %1092 = vmatprep.mubr.f32.mxu0 0.0
        %1093 = vmatmul.mubr.f32.gmra.mrb[0].mxu0 %v813
        %v1094 = vpop.f32.mrb[0].mxu0
        %v1095 = vadd.f32 %v941, %v1094
        %v1096 = vpop.f32.mrb[0].mxu0
        %1097 = vmatprep.mubr.f32.mxu0 0.0
        %1098 = vmatmul.mubr.f32.gmra.mrb[0].mxu0 %v816
        %v1099 = vpop.f32.mrb[0].mxu0
        %v1100 = vadd.f32 %v946, %v1099
        %v1101 = vpop.f32.mrb[0].mxu0
        %1102 = vmatprep.mubr.f32.mxu0 0.0
        %1103 = vmatmul.mubr.f32.gmra.mrb[0].mxu0 %v819
        %v1104 = vpop.f32.mrb[0].mxu0
        %v1105 = vadd.f32 %v951, %v1104
        %v1106 = vpop.f32.mrb[0].mxu0
        %1107 = vmatprep.mubr.f32.mxu0 0.0
        %1108 = vmatmul.mubr.f32.gmra.mrb[0].mxu0 %v822
        %v1109 = vpop.f32.mrb[0].mxu0
        %v1110 = vadd.f32 %v956, %v1109
        %v1111 = vpop.f32.mrb[0].mxu0
        %1112 = vmatprep.mubr.f32.mxu0 0.0
        %1113 = vmatmul.mubr.f32.gmra.mrb[0].mxu0 %v825
        %v1114 = vpop.f32.mrb[0].mxu0
        %v1115 = vadd.f32 %v961, %v1114
        %v1116 = vpop.f32.mrb[0].mxu0
        %1117 = vmatprep.mubr.f32.mxu0 0.0
        %1118 = vmatmul.mubr.f32.gmra.mrb[0].mxu0 %v828
        %v1119 = vpop.f32.mrb[0].mxu0
        %v1120 = vadd.f32 %v966, %v1119
        %v1121 = vpop.f32.mrb[0].mxu0
        %1122 = vmatprep.mubr.f32.mxu0 0.0
        %1123 = vmatmul.mubr.f32.gmra.mrb[0].mxu0 %v831
        %v1124 = vpop.f32.mrb[0].mxu0
        %v1125 = vadd.f32 %v971, %v1124
        %v1126 = vpop.f32.mrb[0].mxu0
        %1127 = vmatprep.mubr.f32.mxu0 0.0
        %1128 = vmatmul.mubr.f32.gmra.mrb[0].mxu0 %v834
        %v1129 = vpop.f32.mrb[0].mxu0
        %v1130 = vadd.f32 %v976, %v1129
        %v1131 = vpop.f32.mrb[0].mxu0
        %1132 = vmatprep.mubr.f32.mxu0 0.0
        %1133 = vmatmul.mubr.f32.gmra.mrb[0].mxu0 %v837
        %v1134 = vpop.f32.mrb[0].mxu0
        %v1135 = vadd.f32 %v981, %v1134
        %v1136 = vpop.f32.mrb[0].mxu0
        %1137 = vmatprep.mubr.f32.mxu0 0.0
        %1138 = vmatmul.mubr.f32.gmra.mrb[0].mxu0 %v840
        %v1139 = vpop.f32.mrb[0].mxu0
        %v1140 = vadd.f32 %v986, %v1139
        %v1141 = vpop.f32.mrb[0].mxu0
        %1142 = vmatprep.mubr.f32.mxu0 0.0
        %1143 = vmatmul.mubr.f32.gmra.mrb[0].mxu0 %v843
        %v1144 = vpop.f32.mrb[0].mxu0
        %v1145 = vadd.f32 %v991, %v1144
        %v1146 = vpop.f32.mrb[0].mxu0
        %1147 = vmatprep.mubr.f32.mxu0 0.0
        %1148 = vmatmul.mubr.f32.gmra.mrb[0].mxu0 %v846
        %v1149 = vpop.f32.mrb[0].mxu0
        %v1150 = vadd.f32 %v996, %v1149
        %v1151 = vpop.f32.mrb[0].mxu0
        %1152 = vmatprep.mubr.f32.mxu0 0.0
        %1153 = vmatmul.mubr.f32.gmra.mrb[0].mxu0 %v849
        %v1154 = vpop.f32.mrb[0].mxu0
        %v1155 = vadd.f32 %v1001, %v1154
        %v1156 = vpop.f32.mrb[0].mxu0
        %1157 = vmatprep.mubr.f32.mxu0 0.0
        %1158 = vmatmul.mubr.f32.gmra.mrb[0].mxu0 %v852
        %v1159 = vpop.f32.mrb[0].mxu0
        %v1160 = vadd.f32 %v1006, %v1159
        %v1161 = vpop.f32.mrb[0].mxu0
        %1162 = vdwg.mxu0
        %s1163 = scalar_lea.vmem %s1, 32
        %v1164 = vld [vmem:[%s1163] sm:$0xff]
        %v1165 = vld [vmem:[%s1163 + $0x8] sm:$0xf]
        %v1167 = vsel %vm811, %v804, 0
        %v1170 = vsel %vm811, %v805, 0
        %v1173 = vsel %vm860, %v1165, 0
        %1175 = vmatprep.subr.mxu0 0.0
        %1176 = vmatpush1.msra.mxu0 %v1164
        %1177 = vmatprep.subr.mxu0 0.0
        %1178 = vmatpush1.msra.mxu0 %v1173
        %1179 = vmatprep.subr.mxu0 0.0
        %1180 = vmatpush1.msra.mxu0 0.0
        %1181 = vmatprep.subr.mxu0 0.0
        %1182 = vmatpush1.msra.mxu0 0.0
        %1183 = vmatprep.subr.mxu0 0.0
        %1184 = vmatpush1.msra.mxu0 0.0
        %1185 = vmatprep.subr.mxu0 0.0
        %1186 = vmatpush1.msra.mxu0 0.0
        %1187 = vmatprep.subr.mxu0 0.0
        %1188 = vmatpush1.msra.mxu0 0.0
        %1189 = vmatprep.subr.mxu0 0.0
        %1190 = vmatpush1.msra.mxu0 0.0
        %1191 = vmatprep.subr.mxu0 0.0
        %1192 = vmatpush1.msra.mxu0 0.0
        %1193 = vmatprep.subr.mxu0 0.0
        %1194 = vmatpush1.msra.mxu0 0.0
        %1195 = vmatprep.subr.mxu0 0.0
        %1196 = vmatpush1.msra.mxu0 0.0
        %1197 = vmatprep.subr.mxu0 0.0
        %1198 = vmatpush1.msra.mxu0 0.0
        %1199 = vmatprep.subr.mxu0 0.0
        %1200 = vmatpush1.msra.mxu0 0.0
        %1201 = vmatprep.subr.mxu0 0.0
        %1202 = vmatpush1.msra.mxu0 0.0
        %1203 = vmatprep.subr.mxu0 0.0
        %1204 = vmatpush1.msra.mxu0 0.0
        %1205 = vmatprep.subr.mxu0 0.0
        %1206 = vmatpush1.msra.mxu0 0.0
        %1207 = vmatprep.subr.mxu0 0.0
        %1208 = vmatpush1.msra.mxu0 0.0
        %1209 = vmatprep.subr.mxu0 0.0
        %1210 = vmatpush1.msra.mxu0 0.0
        %1211 = vmatprep.subr.mxu0 0.0
        %1212 = vmatpush1.msra.mxu0 0.0
        %1213 = vmatprep.subr.mxu0 0.0
        %1214 = vmatpush1.msra.mxu0 0.0
        %1215 = vmatprep.subr.mxu0 0.0
        %1216 = vmatpush1.msra.mxu0 0.0
        %1217 = vmatprep.subr.mxu0 0.0
        %1218 = vmatpush1.msra.mxu0 0.0
        %1219 = vmatprep.subr.mxu0 0.0
        %1220 = vmatpush1.msra.mxu0 0.0
        %1221 = vmatprep.subr.mxu0 0.0
        %1222 = vmatpush1.msra.mxu0 0.0
        %1223 = vmatprep.subr.mxu0 0.0
        %1224 = vmatpush1.msra.mxu0 0.0
        %1225 = vmatprep.subr.mxu0 0.0
        %1226 = vmatpush1.msra.mxu0 0.0
        %1227 = vmatprep.subr.mxu0 0.0
        %1228 = vmatpush1.msra.mxu0 0.0
        %1229 = vmatprep.subr.mxu0 0.0
        %1230 = vmatpush1.msra.mxu0 0.0
        %1231 = vmatprep.subr.mxu0 0.0
        %1232 = vmatpush1.msra.mxu0 0.0
        %1233 = vmatprep.subr.mxu0 0.0
        %1234 = vmatpush1.msra.mxu0 0.0
        %1235 = vmatprep.subr.mxu0 0.0
        %1236 = vmatpush1.msra.mxu0 0.0
        %1237 = vmatprep.subr.mxu0 0.0
        %1238 = vmatpush1.msra.mxu0 0.0
        %1239 = vmatprep.mubr.f32.mxu0 0.0
        %1240 = vmatmul.mubr.f32.gmra.mrb[0].mxu0 %v819
        %v1241 = vpop.f32.mrb[0].mxu0
        %v1242 = vadd.f32 0.0, %v1241
        %v1243 = vpop.f32.mrb[0].mxu0
        %1244 = vmatprep.mubr.f32.mxu0 0.0
        %1245 = vmatmul.mubr.f32.gmra.mrb[0].mxu0 %v822
        %v1246 = vpop.f32.mrb[0].mxu0
        %v1247 = vadd.f32 0.0, %v1246
        %v1248 = vpop.f32.mrb[0].mxu0
        %1249 = vmatprep.mubr.f32.mxu0 0.0
        %1250 = vmatmul.mubr.f32.gmra.mrb[0].mxu0 %v825
        %v1251 = vpop.f32.mrb[0].mxu0
        %v1252 = vadd.f32 0.0, %v1251
        %v1253 = vpop.f32.mrb[0].mxu0
        %1254 = vmatprep.mubr.f32.mxu0 0.0
        %1255 = vmatmul.mubr.f32.gmra.mrb[0].mxu0 %v828
        %v1256 = vpop.f32.mrb[0].mxu0
        %v1257 = vadd.f32 0.0, %v1256
        %v1258 = vpop.f32.mrb[0].mxu0
        %1259 = vmatprep.mubr.f32.mxu0 0.0
        %1260 = vmatmul.mubr.f32.gmra.mrb[0].mxu0 %v831
        %v1261 = vpop.f32.mrb[0].mxu0
        %v1262 = vadd.f32 0.0, %v1261
        %v1263 = vpop.f32.mrb[0].mxu0
        %1264 = vmatprep.mubr.f32.mxu0 0.0
        %1265 = vmatmul.mubr.f32.gmra.mrb[0].mxu0 %v834
        %v1266 = vpop.f32.mrb[0].mxu0
        %v1267 = vadd.f32 0.0, %v1266
        %v1268 = vpop.f32.mrb[0].mxu0
        %1269 = vmatprep.mubr.f32.mxu0 0.0
        %1270 = vmatmul.mubr.f32.gmra.mrb[0].mxu0 %v837
        %v1271 = vpop.f32.mrb[0].mxu0
        %v1272 = vadd.f32 0.0, %v1271
        %v1273 = vpop.f32.mrb[0].mxu0
        %1274 = vmatprep.mubr.f32.mxu0 0.0
        %1275 = vmatmul.mubr.f32.gmra.mrb[0].mxu0 %v840
        %v1276 = vpop.f32.mrb[0].mxu0
        %v1277 = vadd.f32 0.0, %v1276
        %v1278 = vpop.f32.mrb[0].mxu0
        %1279 = vmatprep.mubr.f32.mxu0 0.0
        %1280 = vmatmul.mubr.f32.gmra.mrb[0].mxu0 %v843
        %v1281 = vpop.f32.mrb[0].mxu0
        %v1282 = vadd.f32 0.0, %v1281
        %v1283 = vpop.f32.mrb[0].mxu0
        %1284 = vmatprep.mubr.f32.mxu0 0.0
        %1285 = vmatmul.mubr.f32.gmra.mrb[0].mxu0 %v846
        %v1286 = vpop.f32.mrb[0].mxu0
        %v1287 = vadd.f32 0.0, %v1286
        %v1288 = vpop.f32.mrb[0].mxu0
        %1289 = vmatprep.mubr.f32.mxu0 0.0
        %1290 = vmatmul.mubr.f32.gmra.mrb[0].mxu0 %v849
        %v1291 = vpop.f32.mrb[0].mxu0
        %v1292 = vadd.f32 0.0, %v1291
        %v1293 = vpop.f32.mrb[0].mxu0
        %1294 = vmatprep.mubr.f32.mxu0 0.0
        %1295 = vmatmul.mubr.f32.gmra.mrb[0].mxu0 %v852
        %v1296 = vpop.f32.mrb[0].mxu0
        %v1297 = vadd.f32 0.0, %v1296
        %v1298 = vpop.f32.mrb[0].mxu0
        %1299 = vmatprep.mubr.f32.mxu0 0.0
        %1300 = vmatmul.mubr.f32.gmra.mrb[0].mxu0 %v855
        %v1301 = vpop.f32.mrb[0].mxu0
        %v1302 = vadd.f32 0.0, %v1301
        %v1303 = vpop.f32.mrb[0].mxu0
        %1304 = vmatprep.mubr.f32.mxu0 0.0
        %1305 = vmatmul.mubr.f32.gmra.mrb[0].mxu0 %v858
        %v1306 = vpop.f32.mrb[0].mxu0
        %v1307 = vadd.f32 0.0, %v1306
        %v1308 = vpop.f32.mrb[0].mxu0
        %1309 = vmatprep.mubr.f32.mxu0 0.0
        %1310 = vmatmul.mubr.f32.gmra.mrb[0].mxu0 %v1167
        %v1311 = vpop.f32.mrb[0].mxu0
        %v1312 = vadd.f32 0.0, %v1311
        %v1313 = vpop.f32.mrb[0].mxu0
        %1314 = vmatprep.mubr.f32.mxu0 0.0
        %1315 = vmatmul.mubr.f32.gmra.mrb[0].mxu0 %v1170
        %v1316 = vpop.f32.mrb[0].mxu0
        %v1317 = vadd.f32 0.0, %v1316
        %v1318 = vpop.f32.mrb[0].mxu0
        %1319 = vdwg.mxu0
        %v1320 = vadd.f32 %v1085, %v1242
        %v1321 = vadd.f32 %v1090, %v1247
        %v1322 = vadd.f32 %v1095, %v1252
        %v1323 = vadd.f32 %v1100, %v1257
        %v1324 = vadd.f32 %v1105, %v1262
        %v1325 = vadd.f32 %v1110, %v1267
        %v1326 = vadd.f32 %v1115, %v1272
        %v1327 = vadd.f32 %v1120, %v1277
        %v1328 = vadd.f32 %v1125, %v1282
        %v1329 = vadd.f32 %v1130, %v1287
        %v1330 = vadd.f32 %v1135, %v1292
        %v1331 = vadd.f32 %v1140, %v1297
        %v1332 = vadd.f32 %v1145, %v1302
        %v1333 = vadd.f32 %v1150, %v1307
        %v1334 = vadd.f32 %v1155, %v1312
        %v1335 = vadd.f32 %v1160, %v1317
        %v1336 = vld [vmem:[%s2] sm:$0x1]
        %v1338 = vlaneseq
        %v1339 = vshrl.u32 %v1338, 7
        %v1340 = vsub.s32 0, %v1339
        %v1341 = vrot.slane %v1336, %v1340
        %v1343 = vadd.f32 %v1320, %v1341
        %v1344 = vadd.f32 %v1321, %v1341
        %v1345 = vadd.f32 %v1322, %v1341
        %v1346 = vadd.f32 %v1323, %v1341
        %v1347 = vadd.f32 %v1324, %v1341
        %v1348 = vadd.f32 %v1325, %v1341
        %v1349 = vadd.f32 %v1326, %v1341
        %v1350 = vadd.f32 %v1327, %v1341
        %v1351 = vadd.f32 %v1328, %v1341
        %v1352 = vadd.f32 %v1329, %v1341
        %v1353 = vadd.f32 %v1330, %v1341
        %v1354 = vadd.f32 %v1331, %v1341
        %v1355 = vadd.f32 %v1332, %v1341
        %v1356 = vadd.f32 %v1333, %v1341
        %v1357 = vadd.f32 %v1334, %v1341
        %v1358 = vadd.f32 %v1335, %v1341
        %1359 = vst [vmem:[%s210] sm:$0xff] %v1343
        %1360 = vst [vmem:[%s210 + $0x8] sm:$0xff] %v1344
        %1361 = vst [vmem:[%s210 + $0x10] sm:$0xff] %v1345
        %1362 = vst [vmem:[%s210 + $0x18] sm:$0xff] %v1346
        %1363 = vst [vmem:[%s210 + $0x20] sm:$0xff] %v1347
        %1364 = vst [vmem:[%s210 + $0x28] sm:$0xff] %v1348
        %1365 = vst [vmem:[%s210 + $0x30] sm:$0xff] %v1349
        %1366 = vst [vmem:[%s210 + $0x38] sm:$0xff] %v1350
        %1367 = vst [vmem:[%s210 + $0x40] sm:$0xff] %v1351
        %1368 = vst [vmem:[%s210 + $0x48] sm:$0xff] %v1352
        %1369 = vst [vmem:[%s210 + $0x50] sm:$0xff] %v1353
        %1370 = vst [vmem:[%s210 + $0x58] sm:$0xff] %v1354
        %1371 = vst [vmem:[%s210 + $0x60] sm:$0xff] %v1355
        %1372 = vst [vmem:[%s210 + $0x68] sm:$0xff] %v1356
        %1373 = vst [vmem:[%s210 + $0x70] sm:$0xff] %v1357
        %1374 = vst [vmem:[%s210 + $0x78] sm:$0xff] %v1358
        %v1375 = vadd.f32 %v1343, %v1344
        %v1376 = vadd.f32 %v1375, %v1345
        %v1377 = vadd.f32 %v1376, %v1346
        %v1378 = vadd.f32 %v1377, %v1347
        %v1379 = vadd.f32 %v1378, %v1348
        %v1380 = vadd.f32 %v1379, %v1349
        %v1381 = vadd.f32 %v1380, %v1350
        %v1382 = vadd.f32 %v1381, %v1351
        %v1383 = vadd.f32 %v1382, %v1352
        %v1384 = vadd.f32 %v1383, %v1353
        %v1385 = vadd.f32 %v1384, %v1354
        %v1386 = vadd.f32 %v1385, %v1355
        %v1387 = vadd.f32 %v1386, %v1356
        %v1388 = vadd.f32 %v1387, %v1357
        %v1389 = vadd.f32 %v1388, %v1358
        %v1390 = vrot.slane %v1389, 4
        %v1391 = vadd.f32 %v1389, %v1390
        %v1392 = vrot.slane %v1391, 2
        %v1393 = vadd.f32 %v1391, %v1392
        %v1394 = vrot.slane %v1393, 1
        %v1395 = vadd.f32 %v1393, %v1394
        %v1396 = vmul.f32 %v1343, %v1343
        %v1397 = vmul.f32 %v1344, %v1344
        %v1398 = vmul.f32 %v1345, %v1345
        %v1399 = vmul.f32 %v1346, %v1346
        %v1400 = vmul.f32 %v1347, %v1347
        %v1401 = vmul.f32 %v1348, %v1348
        %v1402 = vmul.f32 %v1349, %v1349
        %v1403 = vmul.f32 %v1350, %v1350
        %v1404 = vmul.f32 %v1351, %v1351
        %v1405 = vmul.f32 %v1352, %v1352
        %v1406 = vmul.f32 %v1353, %v1353
        %v1407 = vmul.f32 %v1354, %v1354
        %v1408 = vmul.f32 %v1355, %v1355
        %v1409 = vmul.f32 %v1356, %v1356
        %v1410 = vmul.f32 %v1357, %v1357
        %v1411 = vmul.f32 %v1358, %v1358
        %v1412 = vadd.f32 %v1396, %v1397
        %v1413 = vadd.f32 %v1412, %v1398
        %v1414 = vadd.f32 %v1413, %v1399
        %v1415 = vadd.f32 %v1414, %v1400
        %v1416 = vadd.f32 %v1415, %v1401
        %v1417 = vadd.f32 %v1416, %v1402
        %v1418 = vadd.f32 %v1417, %v1403
        %v1419 = vadd.f32 %v1418, %v1404
        %v1420 = vadd.f32 %v1419, %v1405
        %v1421 = vadd.f32 %v1420, %v1406
        %v1422 = vadd.f32 %v1421, %v1407
        %v1423 = vadd.f32 %v1422, %v1408
        %v1424 = vadd.f32 %v1423, %v1409
        %v1425 = vadd.f32 %v1424, %v1410
        %v1426 = vadd.f32 %v1425, %v1411
        %v1427 = vrot.slane %v1426, 4
        %v1428 = vadd.f32 %v1426, %v1427
        %v1429 = vrot.slane %v1428, 2
        %v1430 = vadd.f32 %v1428, %v1429
        %v1431 = vrot.slane %v1430, 1
        %v1432 = vadd.f32 %v1430, %v1431
        %vm1433 = vcmask 1040384
        %v1434 = vsel %vm1433, %v1395, %v1432
        %1435 = vst [vmem:[%s217] sm:$0x3] %v1434
        %s1436 = sand.u32 %s112, 1
        %s1437 = scalar_lea.sflag [#allocation4], %s1436
        %s1438 = sand.u32 %s112, 1
        %s1439 = smul.addr %s1438, 128
        %s1440 = scalar_lea.vmem [#allocation3], %s1439
        %s1441 = sand.u32 %s140, 1
        %s1442 = scalar_lea.sflag [#allocation6], %s1441
        %s1443 = sand.u32 %s140, 1
        %s1444 = smul.addr %s1443, 2
        %s1445 = scalar_lea.vmem [#allocation5], %s1444
        // Predicated region
        $region37: #{tpu_custom_call.1} parent=31 // pred_check
          %p1446 = pneg %p122
        $region38: #{tpu_custom_call.1} parent=31 // pred_check_branch
          %1448 = sbr.rel (%p1446) target = $region40
        $region39: #{tpu_custom_call.1} parent=31 // pred_region
          %s1449 = smul.u32 8, %s27
          %s1451 = ssub.s32 2048, 2048
          %1452 = vsyncadd %s1437, %s1451
          %s1453 = smul.addr %s1449, 2
          %s1454 = smul.addr %s26, 32
          %s1455 = sadd.s32 %s1453, %s1454
          %s1456 = smul.addr %s1455, 128
          %s1457 = scalar_lea.hbm %s3, %s1456
          %s1458 = sshll.u32 %s1440, 4
          %s1459 = int_to_ptr.vmem [resolvable:$true] %s1458
          %1464 = dma.vmem_to_hbm [thread:$0]  %s1459, 2048, %s1457, %s1437, 128, 128, 8
        $region40: #{tpu_custom_call.1} parent=31 // pred_fallthru
          _
        // Predicated region
        $region41: #{tpu_custom_call.1} parent=31 // pred_check
          %p1465 = pneg %p150
        $region42: #{tpu_custom_call.1} parent=31 // pred_check_branch
          %1467 = sbr.rel (%p1465) target = $region44
        $region43: #{tpu_custom_call.1} parent=31 // pred_region
          %s1469 = ssub.s32 32, 32
          %1470 = vsyncadd %s1442, %s1469
          %s1471 = smul.addr %s26, 2
          %s1472 = sadd.s32 %s27, %s1471
          %s1473 = smul.addr %s1472, 32
          %s1474 = scalar_lea.hbm %s4, %s1473
          %s1476 = sshll.u32 %s1445, 4
          %s1477 = int_to_ptr.vmem [resolvable:$true] %s1476
          %1479 = dma.vmem_to_hbm [thread:$0]  %s1477, 32, %s1474, %s1442
        $region44: #{tpu_custom_call.1} parent=31 // pred_fallthru
          _
      $region32: #{tpu_custom_call.1} parent=5 // pred_fallthru
        _
      %p1480 = scmp.le.s32.totalorder 2, %s17
      // Predicated region
      $region45: #{tpu_custom_call.1} parent=5 // pred_check
        %p1481 = pneg %p1480
      $region46: #{tpu_custom_call.1} parent=5 // pred_check_branch
        %1483 = sbr.rel (%p1481) target = $region48
      $region47: #{tpu_custom_call.1} parent=5 // pred_region
        %s1484 = ssub.s32 %s17, 2
        // Predicated region
        $region49: #{tpu_custom_call.1} parent=47 // pred_check
          %p1485 = pneg %p128
        $region50: #{tpu_custom_call.1} parent=47 // pred_check_branch
          %1487 = sbr.rel (%p1485) target = $region52
        $region51: #{tpu_custom_call.1} parent=47 // pred_region
          %s1488 = sand.u32 %s113, 1
          %s1489 = scalar_lea.sflag [#allocation4], %s1488
          %s1490 = sand.u32 %s113, 1
          %s1491 = smul.addr %s1490, 128
          %s1492 = scalar_lea.vmem [#allocation3], %s1491
          %1493 = dma.done %s1489, 2048
        $region52: #{tpu_custom_call.1} parent=47 // pred_fallthru
          _
        // Predicated region
        $region53: #{tpu_custom_call.1} parent=47 // pred_check
          %p1494 = pneg %p156
        $region54: #{tpu_custom_call.1} parent=47 // pred_check_branch
          %1496 = sbr.rel (%p1494) target = $region56
        $region55: #{tpu_custom_call.1} parent=47 // pred_region
          %s1497 = sand.u32 %s141, 1
          %s1498 = scalar_lea.sflag [#allocation6], %s1497
          %s1499 = sand.u32 %s141, 1
          %s1500 = smul.addr %s1499, 2
          %s1501 = scalar_lea.vmem [#allocation5], %s1500
          %1502 = dma.done %s1498, 32
        $region56: #{tpu_custom_call.1} parent=47 // pred_fallthru
          _
      $region48: #{tpu_custom_call.1} parent=5 // pred_fallthru
        _
    $region6: #{tpu_custom_call.1} parent=1 // loop_footer
      %s21 = sadd.s32 1, %s17
    $region7: #{tpu_custom_call.1} parent=1 // loop_footer_branch
      %16 = sbr.rel target = $region3
    $region8: #{tpu_custom_call.1} parent=1 // loop_exit
      _
    %1503 = vsyncpa [#allocation4], 1
    %s1504 = scalar_lea.sflag [#allocation4], 1
    %1505 = vsyncpa %s1504, 1
    %1506 = vsyncpa [#allocation6], 1
    %s1507 = scalar_lea.sflag [#allocation6], 1
    %1508 = vsyncpa %s1507, 1

</llo_original>
